<compile_context>
chip_gen: v5e
topology: v5e:2x2
jax: 0.10.0
libtpu: 0.0.40
codegen_flags: <defaults>
</compile_context>

<pallas_src>
import functools

import jax
import jax.numpy as jnp
from jax import lax
from jax.experimental import pallas as pl
from jax.experimental.pallas import tpu as pltpu

KSIZE = 7
PAD = 3  # kernel_size=7 -> padding=3 ("same" conv)


def _largest_divisor(n, cap, multiple_of=1):
    for d in range(min(cap, n), 0, -1):
        if n % d == 0 and d % multiple_of == 0:
            return d
    return None


def _pick_batch_block(n):
    # Second-to-last dim of the output block: must equal N or be a multiple of 8.
    if n <= 8:
        return n
    d = _largest_divisor(n, 32, multiple_of=8)
    return d if d is not None else n


def _pick_channel_block(c, bn, hw, itemsize, budget_bytes=4 << 20):
    # Keep each (bn, ct, HW) input buffer under ~4 MiB (double-buffered by the
    # pipeline), comfortably inside v7x's smaller VMEM.
    if bn * c * hw * itemsize <= budget_bytes:
        return c
    cap = max(1, budget_bytes // (bn * hw * itemsize))
    d = _largest_divisor(c, cap, multiple_of=8)
    return d if d is not None else c


def _spatial_attention_kernel(x_ref, w_ref, wcol_ref, o_ref, sum_ref, max_ref,
                              *, C, H, W):
    HW = H * W
    c_idx = pl.program_id(1)
    n_c = pl.num_programs(1)

    # ---- channel reduction (lane-dense, tiled over C) ----
    x = x_ref[...].astype(jnp.float32)          # (bn, ct, HW)
    part_sum = jnp.sum(x, axis=1)               # (bn, HW)
    part_max = jnp.max(x, axis=1)               # (bn, HW)

    @pl.when(c_idx == 0)
    def _init():
        sum_ref[...] = jnp.zeros_like(sum_ref)
        max_ref[...] = jnp.full_like(max_ref, -jnp.inf)

    sum_ref[...] = sum_ref[...] + part_sum
    max_ref[...] = jnp.maximum(max_ref[...], part_max)

    # ---- 7x7 conv + sigmoid on the reduced 2-channel map (last C tile) ----
    @pl.when(c_idx == n_c - 1)
    def _finalize():
        avg = sum_ref[...] * (1.0 / float(C))   # running sum / C (bit-parity)
        mx = max_ref[...]
        wcol = wcol_ref[...]                    # (1, HW) int32: lane -> column index

        def shift_zero(a, d):
            # out[..., i] = a[..., i + d] if 0 <= i + d < HW else 0 (no wrap).
            if d == 0:
                return a
            if abs(d) >= HW:
                return jnp.zeros_like(a)
            pad = jnp.zeros(a.shape[:-1] + (abs(d),), a.dtype)
            if d > 0:
                return jnp.concatenate([a[..., d:], pad], axis=-1)
            return jnp.concatenate([pad, a[..., :d]], axis=-1)

        acc = jnp.zeros(avg.shape, jnp.float32)
        for cin, feat in enumerate((avg, mx)):
            # Hoisted along-W taps: 7 shifted+masked maps, reused by all kh.
            cols = []
            for kw in range(KSIZE):
                dw = kw - PAD
                s = shift_zero(feat, dw)
                if dw > 0:
                    s = jnp.where(wcol < W - dw, s, 0.0)
                elif dw < 0:
                    s = jnp.where(wcol >= -dw, s, 0.0)
                cols.append(s)
            for kh in range(KSIZE):
                dh = kh - PAD
                base = (cin * KSIZE + kh) * KSIZE
                inner = cols[0] * w_ref[base]          # scalar from SMEM
                for kw in range(1, KSIZE):
                    inner = inner + cols[kw] * w_ref[base + kw]
                # along-H tap: whole-row shift by dh*W (zero fill = padding).
                acc = acc + shift_zero(inner, dh * W)

        o_ref[...] = jax.nn.sigmoid(acc).astype(o_ref.dtype)


def spatial_attention(x, conv_weight):
    """x: (N, C, H, W); conv_weight: (1, 2, 7, 7) (Conv2d(2, 1, 7, bias=False))."""
    N, C, H, W = x.shape
    HW = H * W
    assert conv_weight.shape == (1, 2, KSIZE, KSIZE)

    x_flat = x.reshape(N, C, HW)                               # lane-dense view
    w_flat = conv_weight.astype(jnp.float32).reshape(2 * KSIZE * KSIZE)
    wcol = (jnp.arange(HW, dtype=jnp.int32) % W).reshape(1, HW)

    itemsize = jnp.dtype(x.dtype).itemsize
    bn = _pick_batch_block(N)
    ct = _pick_channel_block(C, bn, HW, itemsize)
    grid = (N // bn, C // ct)

    kernel = functools.partial(_spatial_attention_kernel, C=C, H=H, W=W)

    out_flat = pl.pallas_call(
        kernel,
        out_shape=jax.ShapeDtypeStruct((N, HW), x.dtype),
        grid=grid,
        in_specs=[
            pl.BlockSpec((bn, ct, HW), lambda n, c: (n, c, 0)),          # x tile
            pl.BlockSpec(memory_space=pltpu.MemorySpace.SMEM),           # weights
            pl.BlockSpec((1, HW), lambda n, c: (0, 0)),                  # col idx
        ],
        out_specs=pl.BlockSpec((bn, HW), lambda n, c: (n, 0)),
        scratch_shapes=[
            pltpu.VMEM((bn, HW), jnp.float32),   # running channel sum
            pltpu.VMEM((bn, HW), jnp.float32),   # running channel max
        ],
        compiler_params=pltpu.CompilerParams(
            dimension_semantics=("parallel", "arbitrary")),
    )(x_flat, w_flat, wcol)

    return out_flat.reshape(N, 1, H, W)


def _reference(x, conv_weight):
    """Pure-JAX reference mirroring the PyTorch forward (for verification)."""
    avg_out = jnp.mean(x, axis=1, keepdims=True)
    max_out = jnp.max(x, axis=1, keepdims=True)
    feat = jnp.concatenate([avg_out, max_out], axis=1)          # (N, 2, H, W)
    out = lax.conv_general_dilated(
        feat, conv_weight.astype(jnp.float32), window_strides=(1, 1),
        padding=((PAD, PAD), (PAD, PAD)),
        dimension_numbers=("NCHW", "OIHW", "NCHW"))
    return jax.nn.sigmoid(out)


if __name__ == "__main__":
    key = jax.random.PRNGKey(0)
    k_x, k_w = jax.random.split(key)

    N, C, H, W = 2, 4, 16, 16
    x = jax.random.normal(k_x, (N, C, H, W), dtype=jnp.float32)
    # Deterministic synthetic Conv2d(2, 1, 7, bias=False) weight.
    conv_weight = (jax.random.normal(k_w, (1, 2, KSIZE, KSIZE), dtype=jnp.float32)
                   * (1.0 / (2 * KSIZE * KSIZE)) ** 0.5)

    out = jax.block_until_ready(spatial_attention(x, conv_weight))
    ref = _reference(x, conv_weight)

    assert out.shape == (N, 1, H, W)
    assert jnp.allclose(out, ref, atol=1e-4, rtol=1e-4)

    print("KERNEL_OK")
</pallas_src>

<mosaic_0001>
module attributes {stable_mosaic.version = 11 : i64} {
  func.func @_spatial_attention_kernel(%arg0: i32, %arg1: i32, %arg2: memref<2x4x256xf32, #tpu.memory_space<vmem>>, %arg3: memref<98xf32, #tpu.memory_space<smem>>, %arg4: memref<1x256xi32, #tpu.memory_space<vmem>>, %arg5: memref<2x256xf32, #tpu.memory_space<vmem>>, %arg6: memref<2x256xf32, #tpu.memory_space<vmem>>, %arg7: memref<2x256xf32, #tpu.memory_space<vmem>>) attributes {dimension_semantics = [#tpu.dimension_semantics<parallel>, #tpu.dimension_semantics<arbitrary>], iteration_bounds = array<i64: 1, 1>, scalar_prefetch = 0 : i64, scratch_operands = 2 : i64, tpu.core_type = #tpu.core_type<tc>, window_params = [{transform_indices = @transform_0, window_bounds = array<i64: 2, 4, 256>}, {transform_indices = @transform_1, window_bounds = array<i64: 98>}, {pipeline_mode = #tpu.pipeline_mode<synchronous>, transform_indices = @transform_2, window_bounds = array<i64: 1, 256>}, {transform_indices = @transform_3, window_bounds = array<i64: 2, 256>}]} {
    %c0 = arith.constant 0 : index
    %c0_0 = arith.constant 0 : index
    %c0_1 = arith.constant 0 : index
    %0 = vector.load %arg2[%c0, %c0_0, %c0_1] : memref<2x4x256xf32, #tpu.memory_space<vmem>>, vector<2x4x256xf32>
    %cst = arith.constant dense<0.000000e+00> : vector<2x256xf32>
    %1 = vector.multi_reduction <add>, %0, %cst [1] : vector<2x4x256xf32> to vector<2x256xf32>
    %cst_2 = arith.constant dense<0xFF800000> : vector<2x256xf32>
    %2 = vector.multi_reduction <maximumf>, %0, %cst_2 [1] : vector<2x4x256xf32> to vector<2x256xf32>
    %c0_i32 = arith.constant 0 : i32
    %3 = arith.cmpi eq, %arg1, %c0_i32 : i32
    %4 = arith.extui %3 : i1 to i32
    %c0_i32_3 = arith.constant 0 : i32
    %5 = arith.cmpi ne, %4, %c0_i32_3 : i32
    scf.if %5 {
      %cst_14 = arith.constant 0.000000e+00 : f32
      %15 = vector.broadcast %cst_14 : f32 to vector<2x256xf32>
      %c0_15 = arith.constant 0 : index
      %c0_16 = arith.constant 0 : index
      %16 = vector.load %arg6[%c0_15, %c0_16] : memref<2x256xf32, #tpu.memory_space<vmem>>, vector<2x256xf32>
      tpu.vector_store %arg6[%c0_15, %c0_16], %15 {strides = array<i32>} : memref<2x256xf32, #tpu.memory_space<vmem>>, vector<2x256xf32>,
      %cst_17 = arith.constant 0xFF800000 : f32
      %17 = vector.broadcast %cst_17 : f32 to vector<2x256xf32>
      %c0_18 = arith.constant 0 : index
      %c0_19 = arith.constant 0 : index
      %18 = vector.load %arg7[%c0_18, %c0_19] : memref<2x256xf32, #tpu.memory_space<vmem>>, vector<2x256xf32>
      tpu.vector_store %arg7[%c0_18, %c0_19], %17 {strides = array<i32>} : memref<2x256xf32, #tpu.memory_space<vmem>>, vector<2x256xf32>,
    } else {
    }
    %c0_4 = arith.constant 0 : index
    %c0_5 = arith.constant 0 : index
    %6 = vector.load %arg6[%c0_4, %c0_5] : memref<2x256xf32, #tpu.memory_space<vmem>>, vector<2x256xf32>
    %7 = arith.addf %6, %1 : vector<2x256xf32>
    %c0_6 = arith.constant 0 : index
    %c0_7 = arith.constant 0 : index
    %8 = vector.load %arg6[%c0_6, %c0_7] : memref<2x256xf32, #tpu.memory_space<vmem>>, vector<2x256xf32>
    tpu.vector_store %arg6[%c0_6, %c0_7], %7 {strides = array<i32>} : memref<2x256xf32, #tpu.memory_space<vmem>>, vector<2x256xf32>,
    %c0_8 = arith.constant 0 : index
    %c0_9 = arith.constant 0 : index
    %9 = vector.load %arg7[%c0_8, %c0_9] : memref<2x256xf32, #tpu.memory_space<vmem>>, vector<2x256xf32>
    %10 = arith.maximumf %9, %2 : vector<2x256xf32>
    %c0_10 = arith.constant 0 : index
    %c0_11 = arith.constant 0 : index
    %11 = vector.load %arg7[%c0_10, %c0_11] : memref<2x256xf32, #tpu.memory_space<vmem>>, vector<2x256xf32>
    tpu.vector_store %arg7[%c0_10, %c0_11], %10 {strides = array<i32>} : memref<2x256xf32, #tpu.memory_space<vmem>>, vector<2x256xf32>,
    %c0_i32_12 = arith.constant 0 : i32
    %12 = arith.cmpi eq, %arg1, %c0_i32_12 : i32
    %13 = arith.extui %12 : i1 to i32
    %c0_i32_13 = arith.constant 0 : i32
    %14 = arith.cmpi ne, %13, %c0_i32_13 : i32
    scf.if %14 {
      %c0_14 = arith.constant 0 : index
      %c0_15 = arith.constant 0 : index
      %15 = vector.load %arg6[%c0_14, %c0_15] : memref<2x256xf32, #tpu.memory_space<vmem>>, vector<2x256xf32>
      %cst_16 = arith.constant 2.500000e-01 : f32
      %16 = vector.broadcast %cst_16 : f32 to vector<2x256xf32>
      %17 = arith.mulf %15, %16 : vector<2x256xf32>
      %c0_17 = arith.constant 0 : index
      %c0_18 = arith.constant 0 : index
      %18 = vector.load %arg7[%c0_17, %c0_18] : memref<2x256xf32, #tpu.memory_space<vmem>>, vector<2x256xf32>
      %c0_19 = arith.constant 0 : index
      %c0_20 = arith.constant 0 : index
      %19 = vector.load %arg4[%c0_19, %c0_20] : memref<1x256xi32, #tpu.memory_space<vmem>>, vector<1x256xi32>
      %cst_21 = arith.constant 0.000000e+00 : f32
      %20 = vector.broadcast %cst_21 : f32 to vector<2x256xf32>
      %cst_22 = arith.constant 0.000000e+00 : f32
      %21 = vector.broadcast %cst_22 : f32 to vector<2x3xf32>
      %22 = vector.extract_strided_slice %17 {offsets = [0, 0], sizes = [2, 253], strides = [1, 1]} : vector<2x256xf32> to vector<2x253xf32>
      %23 = tpu.concatenate %21, %22 in 1 : vector<2x3xf32>, vector<2x253xf32> -> vector<2x256xf32>
      %c3_i32 = arith.constant 3 : i32
      %24 = vector.broadcast %c3_i32 : i32 to vector<1x256xi32>
      %25 = arith.cmpi sge, %19, %24 : vector<1x256xi32>
      %cst_23 = arith.constant 0.000000e+00 : f32
      %26 = vector.shape_cast %25 : vector<1x256xi1> to vector<1x256xi1>
      %27 = vector.broadcast %26 : vector<1x256xi1> to vector<2x256xi1>
      %28 = vector.broadcast %cst_23 : f32 to vector<2x256xf32>
      %29 = arith.select %27, %23, %28 : vector<2x256xi1>, vector<2x256xf32>
      %cst_24 = arith.constant 0.000000e+00 : f32
      %30 = vector.broadcast %cst_24 : f32 to vector<2x2xf32>
      %31 = vector.extract_strided_slice %17 {offsets = [0, 0], sizes = [2, 254], strides = [1, 1]} : vector<2x256xf32> to vector<2x254xf32>
      %32 = tpu.concatenate %30, %31 in 1 : vector<2x2xf32>, vector<2x254xf32> -> vector<2x256xf32>
      %c2_i32 = arith.constant 2 : i32
      %33 = vector.broadcast %c2_i32 : i32 to vector<1x256xi32>
      %34 = arith.cmpi sge, %19, %33 : vector<1x256xi32>
      %cst_25 = arith.constant 0.000000e+00 : f32
      %35 = vector.shape_cast %34 : vector<1x256xi1> to vector<1x256xi1>
      %36 = vector.broadcast %35 : vector<1x256xi1> to vector<2x256xi1>
      %37 = vector.broadcast %cst_25 : f32 to vector<2x256xf32>
      %38 = arith.select %36, %32, %37 : vector<2x256xi1>, vector<2x256xf32>
      %cst_26 = arith.constant 0.000000e+00 : f32
      %39 = vector.broadcast %cst_26 : f32 to vector<2x1xf32>
      %40 = vector.extract_strided_slice %17 {offsets = [0, 0], sizes = [2, 255], strides = [1, 1]} : vector<2x256xf32> to vector<2x255xf32>
      %41 = tpu.concatenate %39, %40 in 1 : vector<2x1xf32>, vector<2x255xf32> -> vector<2x256xf32>
      %c1_i32 = arith.constant 1 : i32
      %42 = vector.broadcast %c1_i32 : i32 to vector<1x256xi32>
      %43 = arith.cmpi sge, %19, %42 : vector<1x256xi32>
      %cst_27 = arith.constant 0.000000e+00 : f32
      %44 = vector.shape_cast %43 : vector<1x256xi1> to vector<1x256xi1>
      %45 = vector.broadcast %44 : vector<1x256xi1> to vector<2x256xi1>
      %46 = vector.broadcast %cst_27 : f32 to vector<2x256xf32>
      %47 = arith.select %45, %41, %46 : vector<2x256xi1>, vector<2x256xf32>
      %cst_28 = arith.constant 0.000000e+00 : f32
      %48 = vector.broadcast %cst_28 : f32 to vector<2x1xf32>
      %49 = vector.extract_strided_slice %17 {offsets = [0, 1], sizes = [2, 255], strides = [1, 1]} : vector<2x256xf32> to vector<2x255xf32>
      %50 = tpu.concatenate %49, %48 in 1 : vector<2x255xf32>, vector<2x1xf32> -> vector<2x256xf32>
      %c15_i32 = arith.constant 15 : i32
      %51 = vector.broadcast %c15_i32 : i32 to vector<1x256xi32>
      %52 = arith.cmpi slt, %19, %51 : vector<1x256xi32>
      %cst_29 = arith.constant 0.000000e+00 : f32
      %53 = vector.shape_cast %52 : vector<1x256xi1> to vector<1x256xi1>
      %54 = vector.broadcast %53 : vector<1x256xi1> to vector<2x256xi1>
      %55 = vector.broadcast %cst_29 : f32 to vector<2x256xf32>
      %56 = arith.select %54, %50, %55 : vector<2x256xi1>, vector<2x256xf32>
      %cst_30 = arith.constant 0.000000e+00 : f32
      %57 = vector.broadcast %cst_30 : f32 to vector<2x2xf32>
      %58 = vector.extract_strided_slice %17 {offsets = [0, 2], sizes = [2, 254], strides = [1, 1]} : vector<2x256xf32> to vector<2x254xf32>
      %59 = tpu.concatenate %58, %57 in 1 : vector<2x254xf32>, vector<2x2xf32> -> vector<2x256xf32>
      %c14_i32 = arith.constant 14 : i32
      %60 = vector.broadcast %c14_i32 : i32 to vector<1x256xi32>
      %61 = arith.cmpi slt, %19, %60 : vector<1x256xi32>
      %cst_31 = arith.constant 0.000000e+00 : f32
      %62 = vector.shape_cast %61 : vector<1x256xi1> to vector<1x256xi1>
      %63 = vector.broadcast %62 : vector<1x256xi1> to vector<2x256xi1>
      %64 = vector.broadcast %cst_31 : f32 to vector<2x256xf32>
      %65 = arith.select %63, %59, %64 : vector<2x256xi1>, vector<2x256xf32>
      %cst_32 = arith.constant 0.000000e+00 : f32
      %66 = vector.broadcast %cst_32 : f32 to vector<2x3xf32>
      %67 = vector.extract_strided_slice %17 {offsets = [0, 3], sizes = [2, 253], strides = [1, 1]} : vector<2x256xf32> to vector<2x253xf32>
      %68 = tpu.concatenate %67, %66 in 1 : vector<2x253xf32>, vector<2x3xf32> -> vector<2x256xf32>
      %c13_i32 = arith.constant 13 : i32
      %69 = vector.broadcast %c13_i32 : i32 to vector<1x256xi32>
      %70 = arith.cmpi slt, %19, %69 : vector<1x256xi32>
      %cst_33 = arith.constant 0.000000e+00 : f32
      %71 = vector.shape_cast %70 : vector<1x256xi1> to vector<1x256xi1>
      %72 = vector.broadcast %71 : vector<1x256xi1> to vector<2x256xi1>
      %73 = vector.broadcast %cst_33 : f32 to vector<2x256xf32>
      %74 = arith.select %72, %68, %73 : vector<2x256xi1>, vector<2x256xf32>
      %c0_34 = arith.constant 0 : index
      %75 = memref.load %arg3[%c0_34] : memref<98xf32, #tpu.memory_space<smem>>
      %76 = vector.broadcast %75 : f32 to vector<2x256xf32>
      %77 = arith.mulf %29, %76 : vector<2x256xf32>
      %c1 = arith.constant 1 : index
      %78 = memref.load %arg3[%c1] : memref<98xf32, #tpu.memory_space<smem>>
      %79 = vector.broadcast %78 : f32 to vector<2x256xf32>
      %80 = arith.mulf %38, %79 : vector<2x256xf32>
      %81 = arith.addf %77, %80 : vector<2x256xf32>
      %c2 = arith.constant 2 : index
      %82 = memref.load %arg3[%c2] : memref<98xf32, #tpu.memory_space<smem>>
      %83 = vector.broadcast %82 : f32 to vector<2x256xf32>
      %84 = arith.mulf %47, %83 : vector<2x256xf32>
      %85 = arith.addf %81, %84 : vector<2x256xf32>
      %c3 = arith.constant 3 : index
      %86 = memref.load %arg3[%c3] : memref<98xf32, #tpu.memory_space<smem>>
      %87 = vector.broadcast %86 : f32 to vector<2x256xf32>
      %88 = arith.mulf %17, %87 : vector<2x256xf32>
      %89 = arith.addf %85, %88 : vector<2x256xf32>
      %c4 = arith.constant 4 : index
      %90 = memref.load %arg3[%c4] : memref<98xf32, #tpu.memory_space<smem>>
      %91 = vector.broadcast %90 : f32 to vector<2x256xf32>
      %92 = arith.mulf %56, %91 : vector<2x256xf32>
      %93 = arith.addf %89, %92 : vector<2x256xf32>
      %c5 = arith.constant 5 : index
      %94 = memref.load %arg3[%c5] : memref<98xf32, #tpu.memory_space<smem>>
      %95 = vector.broadcast %94 : f32 to vector<2x256xf32>
      %96 = arith.mulf %65, %95 : vector<2x256xf32>
      %97 = arith.addf %93, %96 : vector<2x256xf32>
      %c6 = arith.constant 6 : index
      %98 = memref.load %arg3[%c6] : memref<98xf32, #tpu.memory_space<smem>>
      %99 = vector.broadcast %98 : f32 to vector<2x256xf32>
      %100 = arith.mulf %74, %99 : vector<2x256xf32>
      %101 = arith.addf %97, %100 : vector<2x256xf32>
      %cst_35 = arith.constant 0.000000e+00 : f32
      %102 = vector.broadcast %cst_35 : f32 to vector<2x48xf32>
      %103 = vector.extract_strided_slice %101 {offsets = [0, 0], sizes = [2, 208], strides = [1, 1]} : vector<2x256xf32> to vector<2x208xf32>
      %104 = tpu.concatenate %102, %103 in 1 : vector<2x48xf32>, vector<2x208xf32> -> vector<2x256xf32>
      %105 = arith.addf %20, %104 : vector<2x256xf32>
      %c7 = arith.constant 7 : index
      %106 = memref.load %arg3[%c7] : memref<98xf32, #tpu.memory_space<smem>>
      %107 = vector.broadcast %106 : f32 to vector<2x256xf32>
      %108 = arith.mulf %29, %107 : vector<2x256xf32>
      %c8 = arith.constant 8 : index
      %109 = memref.load %arg3[%c8] : memref<98xf32, #tpu.memory_space<smem>>
      %110 = vector.broadcast %109 : f32 to vector<2x256xf32>
      %111 = arith.mulf %38, %110 : vector<2x256xf32>
      %112 = arith.addf %108, %111 : vector<2x256xf32>
      %c9 = arith.constant 9 : index
      %113 = memref.load %arg3[%c9] : memref<98xf32, #tpu.memory_space<smem>>
      %114 = vector.broadcast %113 : f32 to vector<2x256xf32>
      %115 = arith.mulf %47, %114 : vector<2x256xf32>
      %116 = arith.addf %112, %115 : vector<2x256xf32>
      %c10 = arith.constant 10 : index
      %117 = memref.load %arg3[%c10] : memref<98xf32, #tpu.memory_space<smem>>
      %118 = vector.broadcast %117 : f32 to vector<2x256xf32>
      %119 = arith.mulf %17, %118 : vector<2x256xf32>
      %120 = arith.addf %116, %119 : vector<2x256xf32>
      %c11 = arith.constant 11 : index
      %121 = memref.load %arg3[%c11] : memref<98xf32, #tpu.memory_space<smem>>
      %122 = vector.broadcast %121 : f32 to vector<2x256xf32>
      %123 = arith.mulf %56, %122 : vector<2x256xf32>
      %124 = arith.addf %120, %123 : vector<2x256xf32>
      %c12 = arith.constant 12 : index
      %125 = memref.load %arg3[%c12] : memref<98xf32, #tpu.memory_space<smem>>
      %126 = vector.broadcast %125 : f32 to vector<2x256xf32>
      %127 = arith.mulf %65, %126 : vector<2x256xf32>
      %128 = arith.addf %124, %127 : vector<2x256xf32>
      %c13 = arith.constant 13 : index
      %129 = memref.load %arg3[%c13] : memref<98xf32, #tpu.memory_space<smem>>
      %130 = vector.broadcast %129 : f32 to vector<2x256xf32>
      %131 = arith.mulf %74, %130 : vector<2x256xf32>
      %132 = arith.addf %128, %131 : vector<2x256xf32>
      %cst_36 = arith.constant 0.000000e+00 : f32
      %133 = vector.broadcast %cst_36 : f32 to vector<2x32xf32>
      %134 = vector.extract_strided_slice %132 {offsets = [0, 0], sizes = [2, 224], strides = [1, 1]} : vector<2x256xf32> to vector<2x224xf32>
      %135 = tpu.concatenate %133, %134 in 1 : vector<2x32xf32>, vector<2x224xf32> -> vector<2x256xf32>
      %136 = arith.addf %105, %135 : vector<2x256xf32>
      %c14 = arith.constant 14 : index
      %137 = memref.load %arg3[%c14] : memref<98xf32, #tpu.memory_space<smem>>
      %138 = vector.broadcast %137 : f32 to vector<2x256xf32>
      %139 = arith.mulf %29, %138 : vector<2x256xf32>
      %c15 = arith.constant 15 : index
      %140 = memref.load %arg3[%c15] : memref<98xf32, #tpu.memory_space<smem>>
      %141 = vector.broadcast %140 : f32 to vector<2x256xf32>
      %142 = arith.mulf %38, %141 : vector<2x256xf32>
      %143 = arith.addf %139, %142 : vector<2x256xf32>
      %c16 = arith.constant 16 : index
      %144 = memref.load %arg3[%c16] : memref<98xf32, #tpu.memory_space<smem>>
      %145 = vector.broadcast %144 : f32 to vector<2x256xf32>
      %146 = arith.mulf %47, %145 : vector<2x256xf32>
      %147 = arith.addf %143, %146 : vector<2x256xf32>
      %c17 = arith.constant 17 : index
      %148 = memref.load %arg3[%c17] : memref<98xf32, #tpu.memory_space<smem>>
      %149 = vector.broadcast %148 : f32 to vector<2x256xf32>
      %150 = arith.mulf %17, %149 : vector<2x256xf32>
      %151 = arith.addf %147, %150 : vector<2x256xf32>
      %c18 = arith.constant 18 : index
      %152 = memref.load %arg3[%c18] : memref<98xf32, #tpu.memory_space<smem>>
      %153 = vector.broadcast %152 : f32 to vector<2x256xf32>
      %154 = arith.mulf %56, %153 : vector<2x256xf32>
      %155 = arith.addf %151, %154 : vector<2x256xf32>
      %c19 = arith.constant 19 : index
      %156 = memref.load %arg3[%c19] : memref<98xf32, #tpu.memory_space<smem>>
      %157 = vector.broadcast %156 : f32 to vector<2x256xf32>
      %158 = arith.mulf %65, %157 : vector<2x256xf32>
      %159 = arith.addf %155, %158 : vector<2x256xf32>
      %c20 = arith.constant 20 : index
      %160 = memref.load %arg3[%c20] : memref<98xf32, #tpu.memory_space<smem>>
      %161 = vector.broadcast %160 : f32 to vector<2x256xf32>
      %162 = arith.mulf %74, %161 : vector<2x256xf32>
      %163 = arith.addf %159, %162 : vector<2x256xf32>
      %cst_37 = arith.constant 0.000000e+00 : f32
      %164 = vector.broadcast %cst_37 : f32 to vector<2x16xf32>
      %165 = vector.extract_strided_slice %163 {offsets = [0, 0], sizes = [2, 240], strides = [1, 1]} : vector<2x256xf32> to vector<2x240xf32>
      %166 = tpu.concatenate %164, %165 in 1 : vector<2x16xf32>, vector<2x240xf32> -> vector<2x256xf32>
      %167 = arith.addf %136, %166 : vector<2x256xf32>
      %c21 = arith.constant 21 : index
      %168 = memref.load %arg3[%c21] : memref<98xf32, #tpu.memory_space<smem>>
      %169 = vector.broadcast %168 : f32 to vector<2x256xf32>
      %170 = arith.mulf %29, %169 : vector<2x256xf32>
      %c22 = arith.constant 22 : index
      %171 = memref.load %arg3[%c22] : memref<98xf32, #tpu.memory_space<smem>>
      %172 = vector.broadcast %171 : f32 to vector<2x256xf32>
      %173 = arith.mulf %38, %172 : vector<2x256xf32>
      %174 = arith.addf %170, %173 : vector<2x256xf32>
      %c23 = arith.constant 23 : index
      %175 = memref.load %arg3[%c23] : memref<98xf32, #tpu.memory_space<smem>>
      %176 = vector.broadcast %175 : f32 to vector<2x256xf32>
      %177 = arith.mulf %47, %176 : vector<2x256xf32>
      %178 = arith.addf %174, %177 : vector<2x256xf32>
      %c24 = arith.constant 24 : index
      %179 = memref.load %arg3[%c24] : memref<98xf32, #tpu.memory_space<smem>>
      %180 = vector.broadcast %179 : f32 to vector<2x256xf32>
      %181 = arith.mulf %17, %180 : vector<2x256xf32>
      %182 = arith.addf %178, %181 : vector<2x256xf32>
      %c25 = arith.constant 25 : index
      %183 = memref.load %arg3[%c25] : memref<98xf32, #tpu.memory_space<smem>>
      %184 = vector.broadcast %183 : f32 to vector<2x256xf32>
      %185 = arith.mulf %56, %184 : vector<2x256xf32>
      %186 = arith.addf %182, %185 : vector<2x256xf32>
      %c26 = arith.constant 26 : index
      %187 = memref.load %arg3[%c26] : memref<98xf32, #tpu.memory_space<smem>>
      %188 = vector.broadcast %187 : f32 to vector<2x256xf32>
      %189 = arith.mulf %65, %188 : vector<2x256xf32>
      %190 = arith.addf %186, %189 : vector<2x256xf32>
      %c27 = arith.constant 27 : index
      %191 = memref.load %arg3[%c27] : memref<98xf32, #tpu.memory_space<smem>>
      %192 = vector.broadcast %191 : f32 to vector<2x256xf32>
      %193 = arith.mulf %74, %192 : vector<2x256xf32>
      %194 = arith.addf %190, %193 : vector<2x256xf32>
      %195 = arith.addf %167, %194 : vector<2x256xf32>
      %c28 = arith.constant 28 : index
      %196 = memref.load %arg3[%c28] : memref<98xf32, #tpu.memory_space<smem>>
      %197 = vector.broadcast %196 : f32 to vector<2x256xf32>
      %198 = arith.mulf %29, %197 : vector<2x256xf32>
      %c29 = arith.constant 29 : index
      %199 = memref.load %arg3[%c29] : memref<98xf32, #tpu.memory_space<smem>>
      %200 = vector.broadcast %199 : f32 to vector<2x256xf32>
      %201 = arith.mulf %38, %200 : vector<2x256xf32>
      %202 = arith.addf %198, %201 : vector<2x256xf32>
      %c30 = arith.constant 30 : index
      %203 = memref.load %arg3[%c30] : memref<98xf32, #tpu.memory_space<smem>>
      %204 = vector.broadcast %203 : f32 to vector<2x256xf32>
      %205 = arith.mulf %47, %204 : vector<2x256xf32>
      %206 = arith.addf %202, %205 : vector<2x256xf32>
      %c31 = arith.constant 31 : index
      %207 = memref.load %arg3[%c31] : memref<98xf32, #tpu.memory_space<smem>>
      %208 = vector.broadcast %207 : f32 to vector<2x256xf32>
      %209 = arith.mulf %17, %208 : vector<2x256xf32>
      %210 = arith.addf %206, %209 : vector<2x256xf32>
      %c32 = arith.constant 32 : index
      %211 = memref.load %arg3[%c32] : memref<98xf32, #tpu.memory_space<smem>>
      %212 = vector.broadcast %211 : f32 to vector<2x256xf32>
      %213 = arith.mulf %56, %212 : vector<2x256xf32>
      %214 = arith.addf %210, %213 : vector<2x256xf32>
      %c33 = arith.constant 33 : index
      %215 = memref.load %arg3[%c33] : memref<98xf32, #tpu.memory_space<smem>>
      %216 = vector.broadcast %215 : f32 to vector<2x256xf32>
      %217 = arith.mulf %65, %216 : vector<2x256xf32>
      %218 = arith.addf %214, %217 : vector<2x256xf32>
      %c34 = arith.constant 34 : index
      %219 = memref.load %arg3[%c34] : memref<98xf32, #tpu.memory_space<smem>>
      %220 = vector.broadcast %219 : f32 to vector<2x256xf32>
      %221 = arith.mulf %74, %220 : vector<2x256xf32>
      %222 = arith.addf %218, %221 : vector<2x256xf32>
      %cst_38 = arith.constant 0.000000e+00 : f32
      %223 = vector.broadcast %cst_38 : f32 to vector<2x16xf32>
      %224 = vector.extract_strided_slice %222 {offsets = [0, 16], sizes = [2, 240], strides = [1, 1]} : vector<2x256xf32> to vector<2x240xf32>
      %225 = tpu.concatenate %224, %223 in 1 : vector<2x240xf32>, vector<2x16xf32> -> vector<2x256xf32>
      %226 = arith.addf %195, %225 : vector<2x256xf32>
      %c35 = arith.constant 35 : index
      %227 = memref.load %arg3[%c35] : memref<98xf32, #tpu.memory_space<smem>>
      %228 = vector.broadcast %227 : f32 to vector<2x256xf32>
      %229 = arith.mulf %29, %228 : vector<2x256xf32>
      %c36 = arith.constant 36 : index
      %230 = memref.load %arg3[%c36] : memref<98xf32, #tpu.memory_space<smem>>
      %231 = vector.broadcast %230 : f32 to vector<2x256xf32>
      %232 = arith.mulf %38, %231 : vector<2x256xf32>
      %233 = arith.addf %229, %232 : vector<2x256xf32>
      %c37 = arith.constant 37 : index
      %234 = memref.load %arg3[%c37] : memref<98xf32, #tpu.memory_space<smem>>
      %235 = vector.broadcast %234 : f32 to vector<2x256xf32>
      %236 = arith.mulf %47, %235 : vector<2x256xf32>
      %237 = arith.addf %233, %236 : vector<2x256xf32>
      %c38 = arith.constant 38 : index
      %238 = memref.load %arg3[%c38] : memref<98xf32, #tpu.memory_space<smem>>
      %239 = vector.broadcast %238 : f32 to vector<2x256xf32>
      %240 = arith.mulf %17, %239 : vector<2x256xf32>
      %241 = arith.addf %237, %240 : vector<2x256xf32>
      %c39 = arith.constant 39 : index
      %242 = memref.load %arg3[%c39] : memref<98xf32, #tpu.memory_space<smem>>
      %243 = vector.broadcast %242 : f32 to vector<2x256xf32>
      %244 = arith.mulf %56, %243 : vector<2x256xf32>
      %245 = arith.addf %241, %244 : vector<2x256xf32>
      %c40 = arith.constant 40 : index
      %246 = memref.load %arg3[%c40] : memref<98xf32, #tpu.memory_space<smem>>
      %247 = vector.broadcast %246 : f32 to vector<2x256xf32>
      %248 = arith.mulf %65, %247 : vector<2x256xf32>
      %249 = arith.addf %245, %248 : vector<2x256xf32>
      %c41 = arith.constant 41 : index
      %250 = memref.load %arg3[%c41] : memref<98xf32, #tpu.memory_space<smem>>
      %251 = vector.broadcast %250 : f32 to vector<2x256xf32>
      %252 = arith.mulf %74, %251 : vector<2x256xf32>
      %253 = arith.addf %249, %252 : vector<2x256xf32>
      %cst_39 = arith.constant 0.000000e+00 : f32
      %254 = vector.broadcast %cst_39 : f32 to vector<2x32xf32>
      %255 = vector.extract_strided_slice %253 {offsets = [0, 32], sizes = [2, 224], strides = [1, 1]} : vector<2x256xf32> to vector<2x224xf32>
      %256 = tpu.concatenate %255, %254 in 1 : vector<2x224xf32>, vector<2x32xf32> -> vector<2x256xf32>
      %257 = arith.addf %226, %256 : vector<2x256xf32>
      %c42 = arith.constant 42 : index
      %258 = memref.load %arg3[%c42] : memref<98xf32, #tpu.memory_space<smem>>
      %259 = vector.broadcast %258 : f32 to vector<2x256xf32>
      %260 = arith.mulf %29, %259 : vector<2x256xf32>
      %c43 = arith.constant 43 : index
      %261 = memref.load %arg3[%c43] : memref<98xf32, #tpu.memory_space<smem>>
      %262 = vector.broadcast %261 : f32 to vector<2x256xf32>
      %263 = arith.mulf %38, %262 : vector<2x256xf32>
      %264 = arith.addf %260, %263 : vector<2x256xf32>
      %c44 = arith.constant 44 : index
      %265 = memref.load %arg3[%c44] : memref<98xf32, #tpu.memory_space<smem>>
      %266 = vector.broadcast %265 : f32 to vector<2x256xf32>
      %267 = arith.mulf %47, %266 : vector<2x256xf32>
      %268 = arith.addf %264, %267 : vector<2x256xf32>
      %c45 = arith.constant 45 : index
      %269 = memref.load %arg3[%c45] : memref<98xf32, #tpu.memory_space<smem>>
      %270 = vector.broadcast %269 : f32 to vector<2x256xf32>
      %271 = arith.mulf %17, %270 : vector<2x256xf32>
      %272 = arith.addf %268, %271 : vector<2x256xf32>
      %c46 = arith.constant 46 : index
      %273 = memref.load %arg3[%c46] : memref<98xf32, #tpu.memory_space<smem>>
      %274 = vector.broadcast %273 : f32 to vector<2x256xf32>
      %275 = arith.mulf %56, %274 : vector<2x256xf32>
      %276 = arith.addf %272, %275 : vector<2x256xf32>
      %c47 = arith.constant 47 : index
      %277 = memref.load %arg3[%c47] : memref<98xf32, #tpu.memory_space<smem>>
      %278 = vector.broadcast %277 : f32 to vector<2x256xf32>
      %279 = arith.mulf %65, %278 : vector<2x256xf32>
      %280 = arith.addf %276, %279 : vector<2x256xf32>
      %c48 = arith.constant 48 : index
      %281 = memref.load %arg3[%c48] : memref<98xf32, #tpu.memory_space<smem>>
      %282 = vector.broadcast %281 : f32 to vector<2x256xf32>
      %283 = arith.mulf %74, %282 : vector<2x256xf32>
      %284 = arith.addf %280, %283 : vector<2x256xf32>
      %cst_40 = arith.constant 0.000000e+00 : f32
      %285 = vector.broadcast %cst_40 : f32 to vector<2x48xf32>
      %286 = vector.extract_strided_slice %284 {offsets = [0, 48], sizes = [2, 208], strides = [1, 1]} : vector<2x256xf32> to vector<2x208xf32>
      %287 = tpu.concatenate %286, %285 in 1 : vector<2x208xf32>, vector<2x48xf32> -> vector<2x256xf32>
      %288 = arith.addf %257, %287 : vector<2x256xf32>
      %cst_41 = arith.constant 0.000000e+00 : f32
      %289 = vector.broadcast %cst_41 : f32 to vector<2x3xf32>
      %290 = vector.extract_strided_slice %18 {offsets = [0, 0], sizes = [2, 253], strides = [1, 1]} : vector<2x256xf32> to vector<2x253xf32>
      %291 = tpu.concatenate %289, %290 in 1 : vector<2x3xf32>, vector<2x253xf32> -> vector<2x256xf32>
      %c3_i32_42 = arith.constant 3 : i32
      %292 = vector.broadcast %c3_i32_42 : i32 to vector<1x256xi32>
      %293 = arith.cmpi sge, %19, %292 : vector<1x256xi32>
      %cst_43 = arith.constant 0.000000e+00 : f32
      %294 = vector.shape_cast %293 : vector<1x256xi1> to vector<1x256xi1>
      %295 = vector.broadcast %294 : vector<1x256xi1> to vector<2x256xi1>
      %296 = vector.broadcast %cst_43 : f32 to vector<2x256xf32>
      %297 = arith.select %295, %291, %296 : vector<2x256xi1>, vector<2x256xf32>
      %cst_44 = arith.constant 0.000000e+00 : f32
      %298 = vector.broadcast %cst_44 : f32 to vector<2x2xf32>
      %299 = vector.extract_strided_slice %18 {offsets = [0, 0], sizes = [2, 254], strides = [1, 1]} : vector<2x256xf32> to vector<2x254xf32>
      %300 = tpu.concatenate %298, %299 in 1 : vector<2x2xf32>, vector<2x254xf32> -> vector<2x256xf32>
      %c2_i32_45 = arith.constant 2 : i32
      %301 = vector.broadcast %c2_i32_45 : i32 to vector<1x256xi32>
      %302 = arith.cmpi sge, %19, %301 : vector<1x256xi32>
      %cst_46 = arith.constant 0.000000e+00 : f32
      %303 = vector.shape_cast %302 : vector<1x256xi1> to vector<1x256xi1>
      %304 = vector.broadcast %303 : vector<1x256xi1> to vector<2x256xi1>
      %305 = vector.broadcast %cst_46 : f32 to vector<2x256xf32>
      %306 = arith.select %304, %300, %305 : vector<2x256xi1>, vector<2x256xf32>
      %cst_47 = arith.constant 0.000000e+00 : f32
      %307 = vector.broadcast %cst_47 : f32 to vector<2x1xf32>
      %308 = vector.extract_strided_slice %18 {offsets = [0, 0], sizes = [2, 255], strides = [1, 1]} : vector<2x256xf32> to vector<2x255xf32>
      %309 = tpu.concatenate %307, %308 in 1 : vector<2x1xf32>, vector<2x255xf32> -> vector<2x256xf32>
      %c1_i32_48 = arith.constant 1 : i32
      %310 = vector.broadcast %c1_i32_48 : i32 to vector<1x256xi32>
      %311 = arith.cmpi sge, %19, %310 : vector<1x256xi32>
      %cst_49 = arith.constant 0.000000e+00 : f32
      %312 = vector.shape_cast %311 : vector<1x256xi1> to vector<1x256xi1>
      %313 = vector.broadcast %312 : vector<1x256xi1> to vector<2x256xi1>
      %314 = vector.broadcast %cst_49 : f32 to vector<2x256xf32>
      %315 = arith.select %313, %309, %314 : vector<2x256xi1>, vector<2x256xf32>
      %cst_50 = arith.constant 0.000000e+00 : f32
      %316 = vector.broadcast %cst_50 : f32 to vector<2x1xf32>
      %317 = vector.extract_strided_slice %18 {offsets = [0, 1], sizes = [2, 255], strides = [1, 1]} : vector<2x256xf32> to vector<2x255xf32>
      %318 = tpu.concatenate %317, %316 in 1 : vector<2x255xf32>, vector<2x1xf32> -> vector<2x256xf32>
      %c15_i32_51 = arith.constant 15 : i32
      %319 = vector.broadcast %c15_i32_51 : i32 to vector<1x256xi32>
      %320 = arith.cmpi slt, %19, %319 : vector<1x256xi32>
      %cst_52 = arith.constant 0.000000e+00 : f32
      %321 = vector.shape_cast %320 : vector<1x256xi1> to vector<1x256xi1>
      %322 = vector.broadcast %321 : vector<1x256xi1> to vector<2x256xi1>
      %323 = vector.broadcast %cst_52 : f32 to vector<2x256xf32>
      %324 = arith.select %322, %318, %323 : vector<2x256xi1>, vector<2x256xf32>
      %cst_53 = arith.constant 0.000000e+00 : f32
      %325 = vector.broadcast %cst_53 : f32 to vector<2x2xf32>
      %326 = vector.extract_strided_slice %18 {offsets = [0, 2], sizes = [2, 254], strides = [1, 1]} : vector<2x256xf32> to vector<2x254xf32>
      %327 = tpu.concatenate %326, %325 in 1 : vector<2x254xf32>, vector<2x2xf32> -> vector<2x256xf32>
      %c14_i32_54 = arith.constant 14 : i32
      %328 = vector.broadcast %c14_i32_54 : i32 to vector<1x256xi32>
      %329 = arith.cmpi slt, %19, %328 : vector<1x256xi32>
      %cst_55 = arith.constant 0.000000e+00 : f32
      %330 = vector.shape_cast %329 : vector<1x256xi1> to vector<1x256xi1>
      %331 = vector.broadcast %330 : vector<1x256xi1> to vector<2x256xi1>
      %332 = vector.broadcast %cst_55 : f32 to vector<2x256xf32>
      %333 = arith.select %331, %327, %332 : vector<2x256xi1>, vector<2x256xf32>
      %cst_56 = arith.constant 0.000000e+00 : f32
      %334 = vector.broadcast %cst_56 : f32 to vector<2x3xf32>
      %335 = vector.extract_strided_slice %18 {offsets = [0, 3], sizes = [2, 253], strides = [1, 1]} : vector<2x256xf32> to vector<2x253xf32>
      %336 = tpu.concatenate %335, %334 in 1 : vector<2x253xf32>, vector<2x3xf32> -> vector<2x256xf32>
      %c13_i32_57 = arith.constant 13 : i32
      %337 = vector.broadcast %c13_i32_57 : i32 to vector<1x256xi32>
      %338 = arith.cmpi slt, %19, %337 : vector<1x256xi32>
      %cst_58 = arith.constant 0.000000e+00 : f32
      %339 = vector.shape_cast %338 : vector<1x256xi1> to vector<1x256xi1>
      %340 = vector.broadcast %339 : vector<1x256xi1> to vector<2x256xi1>
      %341 = vector.broadcast %cst_58 : f32 to vector<2x256xf32>
      %342 = arith.select %340, %336, %341 : vector<2x256xi1>, vector<2x256xf32>
      %c49 = arith.constant 49 : index
      %343 = memref.load %arg3[%c49] : memref<98xf32, #tpu.memory_space<smem>>
      %344 = vector.broadcast %343 : f32 to vector<2x256xf32>
      %345 = arith.mulf %297, %344 : vector<2x256xf32>
      %c50 = arith.constant 50 : index
      %346 = memref.load %arg3[%c50] : memref<98xf32, #tpu.memory_space<smem>>
      %347 = vector.broadcast %346 : f32 to vector<2x256xf32>
      %348 = arith.mulf %306, %347 : vector<2x256xf32>
      %349 = arith.addf %345, %348 : vector<2x256xf32>
      %c51 = arith.constant 51 : index
      %350 = memref.load %arg3[%c51] : memref<98xf32, #tpu.memory_space<smem>>
      %351 = vector.broadcast %350 : f32 to vector<2x256xf32>
      %352 = arith.mulf %315, %351 : vector<2x256xf32>
      %353 = arith.addf %349, %352 : vector<2x256xf32>
      %c52 = arith.constant 52 : index
      %354 = memref.load %arg3[%c52] : memref<98xf32, #tpu.memory_space<smem>>
      %355 = vector.broadcast %354 : f32 to vector<2x256xf32>
      %356 = arith.mulf %18, %355 : vector<2x256xf32>
      %357 = arith.addf %353, %356 : vector<2x256xf32>
      %c53 = arith.constant 53 : index
      %358 = memref.load %arg3[%c53] : memref<98xf32, #tpu.memory_space<smem>>
      %359 = vector.broadcast %358 : f32 to vector<2x256xf32>
      %360 = arith.mulf %324, %359 : vector<2x256xf32>
      %361 = arith.addf %357, %360 : vector<2x256xf32>
      %c54 = arith.constant 54 : index
      %362 = memref.load %arg3[%c54] : memref<98xf32, #tpu.memory_space<smem>>
      %363 = vector.broadcast %362 : f32 to vector<2x256xf32>
      %364 = arith.mulf %333, %363 : vector<2x256xf32>
      %365 = arith.addf %361, %364 : vector<2x256xf32>
      %c55 = arith.constant 55 : index
      %366 = memref.load %arg3[%c55] : memref<98xf32, #tpu.memory_space<smem>>
      %367 = vector.broadcast %366 : f32 to vector<2x256xf32>
      %368 = arith.mulf %342, %367 : vector<2x256xf32>
      %369 = arith.addf %365, %368 : vector<2x256xf32>
      %cst_59 = arith.constant 0.000000e+00 : f32
      %370 = vector.broadcast %cst_59 : f32 to vector<2x48xf32>
      %371 = vector.extract_strided_slice %369 {offsets = [0, 0], sizes = [2, 208], strides = [1, 1]} : vector<2x256xf32> to vector<2x208xf32>
      %372 = tpu.concatenate %370, %371 in 1 : vector<2x48xf32>, vector<2x208xf32> -> vector<2x256xf32>
      %373 = arith.addf %288, %372 : vector<2x256xf32>
      %c56 = arith.constant 56 : index
      %374 = memref.load %arg3[%c56] : memref<98xf32, #tpu.memory_space<smem>>
      %375 = vector.broadcast %374 : f32 to vector<2x256xf32>
      %376 = arith.mulf %297, %375 : vector<2x256xf32>
      %c57 = arith.constant 57 : index
      %377 = memref.load %arg3[%c57] : memref<98xf32, #tpu.memory_space<smem>>
      %378 = vector.broadcast %377 : f32 to vector<2x256xf32>
      %379 = arith.mulf %306, %378 : vector<2x256xf32>
      %380 = arith.addf %376, %379 : vector<2x256xf32>
      %c58 = arith.constant 58 : index
      %381 = memref.load %arg3[%c58] : memref<98xf32, #tpu.memory_space<smem>>
      %382 = vector.broadcast %381 : f32 to vector<2x256xf32>
      %383 = arith.mulf %315, %382 : vector<2x256xf32>
      %384 = arith.addf %380, %383 : vector<2x256xf32>
      %c59 = arith.constant 59 : index
      %385 = memref.load %arg3[%c59] : memref<98xf32, #tpu.memory_space<smem>>
      %386 = vector.broadcast %385 : f32 to vector<2x256xf32>
      %387 = arith.mulf %18, %386 : vector<2x256xf32>
      %388 = arith.addf %384, %387 : vector<2x256xf32>
      %c60 = arith.constant 60 : index
      %389 = memref.load %arg3[%c60] : memref<98xf32, #tpu.memory_space<smem>>
      %390 = vector.broadcast %389 : f32 to vector<2x256xf32>
      %391 = arith.mulf %324, %390 : vector<2x256xf32>
      %392 = arith.addf %388, %391 : vector<2x256xf32>
      %c61 = arith.constant 61 : index
      %393 = memref.load %arg3[%c61] : memref<98xf32, #tpu.memory_space<smem>>
      %394 = vector.broadcast %393 : f32 to vector<2x256xf32>
      %395 = arith.mulf %333, %394 : vector<2x256xf32>
      %396 = arith.addf %392, %395 : vector<2x256xf32>
      %c62 = arith.constant 62 : index
      %397 = memref.load %arg3[%c62] : memref<98xf32, #tpu.memory_space<smem>>
      %398 = vector.broadcast %397 : f32 to vector<2x256xf32>
      %399 = arith.mulf %342, %398 : vector<2x256xf32>
      %400 = arith.addf %396, %399 : vector<2x256xf32>
      %cst_60 = arith.constant 0.000000e+00 : f32
      %401 = vector.broadcast %cst_60 : f32 to vector<2x32xf32>
      %402 = vector.extract_strided_slice %400 {offsets = [0, 0], sizes = [2, 224], strides = [1, 1]} : vector<2x256xf32> to vector<2x224xf32>
      %403 = tpu.concatenate %401, %402 in 1 : vector<2x32xf32>, vector<2x224xf32> -> vector<2x256xf32>
      %404 = arith.addf %373, %403 : vector<2x256xf32>
      %c63 = arith.constant 63 : index
      %405 = memref.load %arg3[%c63] : memref<98xf32, #tpu.memory_space<smem>>
      %406 = vector.broadcast %405 : f32 to vector<2x256xf32>
      %407 = arith.mulf %297, %406 : vector<2x256xf32>
      %c64 = arith.constant 64 : index
      %408 = memref.load %arg3[%c64] : memref<98xf32, #tpu.memory_space<smem>>
      %409 = vector.broadcast %408 : f32 to vector<2x256xf32>
      %410 = arith.mulf %306, %409 : vector<2x256xf32>
      %411 = arith.addf %407, %410 : vector<2x256xf32>
      %c65 = arith.constant 65 : index
      %412 = memref.load %arg3[%c65] : memref<98xf32, #tpu.memory_space<smem>>
      %413 = vector.broadcast %412 : f32 to vector<2x256xf32>
      %414 = arith.mulf %315, %413 : vector<2x256xf32>
      %415 = arith.addf %411, %414 : vector<2x256xf32>
      %c66 = arith.constant 66 : index
      %416 = memref.load %arg3[%c66] : memref<98xf32, #tpu.memory_space<smem>>
      %417 = vector.broadcast %416 : f32 to vector<2x256xf32>
      %418 = arith.mulf %18, %417 : vector<2x256xf32>
      %419 = arith.addf %415, %418 : vector<2x256xf32>
      %c67 = arith.constant 67 : index
      %420 = memref.load %arg3[%c67] : memref<98xf32, #tpu.memory_space<smem>>
      %421 = vector.broadcast %420 : f32 to vector<2x256xf32>
      %422 = arith.mulf %324, %421 : vector<2x256xf32>
      %423 = arith.addf %419, %422 : vector<2x256xf32>
      %c68 = arith.constant 68 : index
      %424 = memref.load %arg3[%c68] : memref<98xf32, #tpu.memory_space<smem>>
      %425 = vector.broadcast %424 : f32 to vector<2x256xf32>
      %426 = arith.mulf %333, %425 : vector<2x256xf32>
      %427 = arith.addf %423, %426 : vector<2x256xf32>
      %c69 = arith.constant 69 : index
      %428 = memref.load %arg3[%c69] : memref<98xf32, #tpu.memory_space<smem>>
      %429 = vector.broadcast %428 : f32 to vector<2x256xf32>
      %430 = arith.mulf %342, %429 : vector<2x256xf32>
      %431 = arith.addf %427, %430 : vector<2x256xf32>
      %cst_61 = arith.constant 0.000000e+00 : f32
      %432 = vector.broadcast %cst_61 : f32 to vector<2x16xf32>
      %433 = vector.extract_strided_slice %431 {offsets = [0, 0], sizes = [2, 240], strides = [1, 1]} : vector<2x256xf32> to vector<2x240xf32>
      %434 = tpu.concatenate %432, %433 in 1 : vector<2x16xf32>, vector<2x240xf32> -> vector<2x256xf32>
      %435 = arith.addf %404, %434 : vector<2x256xf32>
      %c70 = arith.constant 70 : index
      %436 = memref.load %arg3[%c70] : memref<98xf32, #tpu.memory_space<smem>>
      %437 = vector.broadcast %436 : f32 to vector<2x256xf32>
      %438 = arith.mulf %297, %437 : vector<2x256xf32>
      %c71 = arith.constant 71 : index
      %439 = memref.load %arg3[%c71] : memref<98xf32, #tpu.memory_space<smem>>
      %440 = vector.broadcast %439 : f32 to vector<2x256xf32>
      %441 = arith.mulf %306, %440 : vector<2x256xf32>
      %442 = arith.addf %438, %441 : vector<2x256xf32>
      %c72 = arith.constant 72 : index
      %443 = memref.load %arg3[%c72] : memref<98xf32, #tpu.memory_space<smem>>
      %444 = vector.broadcast %443 : f32 to vector<2x256xf32>
      %445 = arith.mulf %315, %444 : vector<2x256xf32>
      %446 = arith.addf %442, %445 : vector<2x256xf32>
      %c73 = arith.constant 73 : index
      %447 = memref.load %arg3[%c73] : memref<98xf32, #tpu.memory_space<smem>>
      %448 = vector.broadcast %447 : f32 to vector<2x256xf32>
      %449 = arith.mulf %18, %448 : vector<2x256xf32>
      %450 = arith.addf %446, %449 : vector<2x256xf32>
      %c74 = arith.constant 74 : index
      %451 = memref.load %arg3[%c74] : memref<98xf32, #tpu.memory_space<smem>>
      %452 = vector.broadcast %451 : f32 to vector<2x256xf32>
      %453 = arith.mulf %324, %452 : vector<2x256xf32>
      %454 = arith.addf %450, %453 : vector<2x256xf32>
      %c75 = arith.constant 75 : index
      %455 = memref.load %arg3[%c75] : memref<98xf32, #tpu.memory_space<smem>>
      %456 = vector.broadcast %455 : f32 to vector<2x256xf32>
      %457 = arith.mulf %333, %456 : vector<2x256xf32>
      %458 = arith.addf %454, %457 : vector<2x256xf32>
      %c76 = arith.constant 76 : index
      %459 = memref.load %arg3[%c76] : memref<98xf32, #tpu.memory_space<smem>>
      %460 = vector.broadcast %459 : f32 to vector<2x256xf32>
      %461 = arith.mulf %342, %460 : vector<2x256xf32>
      %462 = arith.addf %458, %461 : vector<2x256xf32>
      %463 = arith.addf %435, %462 : vector<2x256xf32>
      %c77 = arith.constant 77 : index
      %464 = memref.load %arg3[%c77] : memref<98xf32, #tpu.memory_space<smem>>
      %465 = vector.broadcast %464 : f32 to vector<2x256xf32>
      %466 = arith.mulf %297, %465 : vector<2x256xf32>
      %c78 = arith.constant 78 : index
      %467 = memref.load %arg3[%c78] : memref<98xf32, #tpu.memory_space<smem>>
      %468 = vector.broadcast %467 : f32 to vector<2x256xf32>
      %469 = arith.mulf %306, %468 : vector<2x256xf32>
      %470 = arith.addf %466, %469 : vector<2x256xf32>
      %c79 = arith.constant 79 : index
      %471 = memref.load %arg3[%c79] : memref<98xf32, #tpu.memory_space<smem>>
      %472 = vector.broadcast %471 : f32 to vector<2x256xf32>
      %473 = arith.mulf %315, %472 : vector<2x256xf32>
      %474 = arith.addf %470, %473 : vector<2x256xf32>
      %c80 = arith.constant 80 : index
      %475 = memref.load %arg3[%c80] : memref<98xf32, #tpu.memory_space<smem>>
      %476 = vector.broadcast %475 : f32 to vector<2x256xf32>
      %477 = arith.mulf %18, %476 : vector<2x256xf32>
      %478 = arith.addf %474, %477 : vector<2x256xf32>
      %c81 = arith.constant 81 : index
      %479 = memref.load %arg3[%c81] : memref<98xf32, #tpu.memory_space<smem>>
      %480 = vector.broadcast %479 : f32 to vector<2x256xf32>
      %481 = arith.mulf %324, %480 : vector<2x256xf32>
      %482 = arith.addf %478, %481 : vector<2x256xf32>
      %c82 = arith.constant 82 : index
      %483 = memref.load %arg3[%c82] : memref<98xf32, #tpu.memory_space<smem>>
      %484 = vector.broadcast %483 : f32 to vector<2x256xf32>
      %485 = arith.mulf %333, %484 : vector<2x256xf32>
      %486 = arith.addf %482, %485 : vector<2x256xf32>
      %c83 = arith.constant 83 : index
      %487 = memref.load %arg3[%c83] : memref<98xf32, #tpu.memory_space<smem>>
      %488 = vector.broadcast %487 : f32 to vector<2x256xf32>
      %489 = arith.mulf %342, %488 : vector<2x256xf32>
      %490 = arith.addf %486, %489 : vector<2x256xf32>
      %cst_62 = arith.constant 0.000000e+00 : f32
      %491 = vector.broadcast %cst_62 : f32 to vector<2x16xf32>
      %492 = vector.extract_strided_slice %490 {offsets = [0, 16], sizes = [2, 240], strides = [1, 1]} : vector<2x256xf32> to vector<2x240xf32>
      %493 = tpu.concatenate %492, %491 in 1 : vector<2x240xf32>, vector<2x16xf32> -> vector<2x256xf32>
      %494 = arith.addf %463, %493 : vector<2x256xf32>
      %c84 = arith.constant 84 : index
      %495 = memref.load %arg3[%c84] : memref<98xf32, #tpu.memory_space<smem>>
      %496 = vector.broadcast %495 : f32 to vector<2x256xf32>
      %497 = arith.mulf %297, %496 : vector<2x256xf32>
      %c85 = arith.constant 85 : index
      %498 = memref.load %arg3[%c85] : memref<98xf32, #tpu.memory_space<smem>>
      %499 = vector.broadcast %498 : f32 to vector<2x256xf32>
      %500 = arith.mulf %306, %499 : vector<2x256xf32>
      %501 = arith.addf %497, %500 : vector<2x256xf32>
      %c86 = arith.constant 86 : index
      %502 = memref.load %arg3[%c86] : memref<98xf32, #tpu.memory_space<smem>>
      %503 = vector.broadcast %502 : f32 to vector<2x256xf32>
      %504 = arith.mulf %315, %503 : vector<2x256xf32>
      %505 = arith.addf %501, %504 : vector<2x256xf32>
      %c87 = arith.constant 87 : index
      %506 = memref.load %arg3[%c87] : memref<98xf32, #tpu.memory_space<smem>>
      %507 = vector.broadcast %506 : f32 to vector<2x256xf32>
      %508 = arith.mulf %18, %507 : vector<2x256xf32>
      %509 = arith.addf %505, %508 : vector<2x256xf32>
      %c88 = arith.constant 88 : index
      %510 = memref.load %arg3[%c88] : memref<98xf32, #tpu.memory_space<smem>>
      %511 = vector.broadcast %510 : f32 to vector<2x256xf32>
      %512 = arith.mulf %324, %511 : vector<2x256xf32>
      %513 = arith.addf %509, %512 : vector<2x256xf32>
      %c89 = arith.constant 89 : index
      %514 = memref.load %arg3[%c89] : memref<98xf32, #tpu.memory_space<smem>>
      %515 = vector.broadcast %514 : f32 to vector<2x256xf32>
      %516 = arith.mulf %333, %515 : vector<2x256xf32>
      %517 = arith.addf %513, %516 : vector<2x256xf32>
      %c90 = arith.constant 90 : index
      %518 = memref.load %arg3[%c90] : memref<98xf32, #tpu.memory_space<smem>>
      %519 = vector.broadcast %518 : f32 to vector<2x256xf32>
      %520 = arith.mulf %342, %519 : vector<2x256xf32>
      %521 = arith.addf %517, %520 : vector<2x256xf32>
      %cst_63 = arith.constant 0.000000e+00 : f32
      %522 = vector.broadcast %cst_63 : f32 to vector<2x32xf32>
      %523 = vector.extract_strided_slice %521 {offsets = [0, 32], sizes = [2, 224], strides = [1, 1]} : vector<2x256xf32> to vector<2x224xf32>
      %524 = tpu.concatenate %523, %522 in 1 : vector<2x224xf32>, vector<2x32xf32> -> vector<2x256xf32>
      %525 = arith.addf %494, %524 : vector<2x256xf32>
      %c91 = arith.constant 91 : index
      %526 = memref.load %arg3[%c91] : memref<98xf32, #tpu.memory_space<smem>>
      %527 = vector.broadcast %526 : f32 to vector<2x256xf32>
      %528 = arith.mulf %297, %527 : vector<2x256xf32>
      %c92 = arith.constant 92 : index
      %529 = memref.load %arg3[%c92] : memref<98xf32, #tpu.memory_space<smem>>
      %530 = vector.broadcast %529 : f32 to vector<2x256xf32>
      %531 = arith.mulf %306, %530 : vector<2x256xf32>
      %532 = arith.addf %528, %531 : vector<2x256xf32>
      %c93 = arith.constant 93 : index
      %533 = memref.load %arg3[%c93] : memref<98xf32, #tpu.memory_space<smem>>
      %534 = vector.broadcast %533 : f32 to vector<2x256xf32>
      %535 = arith.mulf %315, %534 : vector<2x256xf32>
      %536 = arith.addf %532, %535 : vector<2x256xf32>
      %c94 = arith.constant 94 : index
      %537 = memref.load %arg3[%c94] : memref<98xf32, #tpu.memory_space<smem>>
      %538 = vector.broadcast %537 : f32 to vector<2x256xf32>
      %539 = arith.mulf %18, %538 : vector<2x256xf32>
      %540 = arith.addf %536, %539 : vector<2x256xf32>
      %c95 = arith.constant 95 : index
      %541 = memref.load %arg3[%c95] : memref<98xf32, #tpu.memory_space<smem>>
      %542 = vector.broadcast %541 : f32 to vector<2x256xf32>
      %543 = arith.mulf %324, %542 : vector<2x256xf32>
      %544 = arith.addf %540, %543 : vector<2x256xf32>
      %c96 = arith.constant 96 : index
      %545 = memref.load %arg3[%c96] : memref<98xf32, #tpu.memory_space<smem>>
      %546 = vector.broadcast %545 : f32 to vector<2x256xf32>
      %547 = arith.mulf %333, %546 : vector<2x256xf32>
      %548 = arith.addf %544, %547 : vector<2x256xf32>
      %c97 = arith.constant 97 : index
      %549 = memref.load %arg3[%c97] : memref<98xf32, #tpu.memory_space<smem>>
      %550 = vector.broadcast %549 : f32 to vector<2x256xf32>
      %551 = arith.mulf %342, %550 : vector<2x256xf32>
      %552 = arith.addf %548, %551 : vector<2x256xf32>
      %cst_64 = arith.constant 0.000000e+00 : f32
      %553 = vector.broadcast %cst_64 : f32 to vector<2x48xf32>
      %554 = vector.extract_strided_slice %552 {offsets = [0, 48], sizes = [2, 208], strides = [1, 1]} : vector<2x256xf32> to vector<2x208xf32>
      %555 = tpu.concatenate %554, %553 in 1 : vector<2x208xf32>, vector<2x48xf32> -> vector<2x256xf32>
      %556 = arith.addf %525, %555 : vector<2x256xf32>
      %557 = arith.negf %556 : vector<2x256xf32>
      %558 = math.exp %557 : vector<2x256xf32>
      %cst_65 = arith.constant 1.000000e+00 : f32
      %559 = vector.broadcast %cst_65 : f32 to vector<2x256xf32>
      %560 = arith.addf %559, %558 : vector<2x256xf32>
      %561 = arith.divf %559, %560 : vector<2x256xf32>
      %c0_66 = arith.constant 0 : index
      %c0_67 = arith.constant 0 : index
      %562 = vector.load %arg5[%c0_66, %c0_67] : memref<2x256xf32, #tpu.memory_space<vmem>>, vector<2x256xf32>
      tpu.vector_store %arg5[%c0_66, %c0_67], %561 {strides = array<i32>} : memref<2x256xf32, #tpu.memory_space<vmem>>, vector<2x256xf32>,
    } else {
    }
    return
  }
  func.func @transform_0(%arg0: i32, %arg1: i32) -> (i32, i32, i32) {
    %c0_i32 = arith.constant 0 : i32
    %c0_i32_0 = arith.constant 0 : i32
    return %arg0, %arg1, %c0_i32 : i32, i32, i32
  }
  func.func @transform_1(%arg0: i32, %arg1: i32) -> i32 {
    %c0_i32 = arith.constant 0 : i32
    %c0_i32_0 = arith.constant 0 : i32
    return %c0_i32 : i32
  }
  func.func @transform_2(%arg0: i32, %arg1: i32) -> (i32, i32) {
    %c0_i32 = arith.constant 0 : i32
    %c0_i32_0 = arith.constant 0 : i32
    %c0_i32_1 = arith.constant 0 : i32
    return %c0_i32, %c0_i32_0 : i32, i32
  }
  func.func @transform_3(%arg0: i32, %arg1: i32) -> (i32, i32) {
    %c0_i32 = arith.constant 0 : i32
    %c0_i32_0 = arith.constant 0 : i32
    return %arg0, %c0_i32 : i32, i32
  }
}

</mosaic_0001>

<llo_original>
// kernel: tpu_custom_call.1
$region0: #{tpu_custom_call.1}
  #allocation0 [shape = 'u32[]', space=smem, size = 0x4, offset = 0x4, fixed_abs, tag = 'smem constant byte address 0x4 - core index']
  #allocation1 [shape = 'u32[72,128]{1,0:T(1,128)}', space=vmem, size = 0x9000, scoped, tag = 'internal scratch']
  #allocation2 [shape = 'f32[2,256]{1,0:T(2,128)}', space=vmem, size = 0x800, scoped, tag = 'scratch operand']
  #allocation3 [shape = 'f32[2,256]{1,0:T(2,128)}', space=vmem, size = 0x800, scoped, tag = 'scratch operand']
  %s0 = inlined_call_operand.hbm [shape: f32[2,4,256], index: 0, kind: input, shape index: {}]
  %s1 = inlined_call_operand.hbm [shape: f32[98], index: 1, kind: input, shape index: {}]
  %s2 = inlined_call_operand.hbm [shape: s32[1,256], index: 2, kind: input, shape index: {}]
  %s3 = inlined_call_operand.hbm [shape: f32[2,256], index: 3, kind: output, shape index: {}]
  %s4 = sld [smem:[#allocation0]]
  $region42: #{tpu_custom_call.1} parent=0
    _
  %s6 = ssub.s32 1, %s4
  %s7 = scalar_select 0, %s6, %s4
  $region1: #{tpu_custom_call.1} parent=0
    #allocation4 [shape = 'u8[8192]{0}', space=vmem, size = 0x2000, scoped, tag = 'input window, operand 0, single buffered']
    #allocation5 [shape = 's32[1]{0}', space=sflag, size = 0x4, scoped, tag = 'scoped memory for tpu_custom_call.1']
    #allocation6 [shape = 's32[1]{0}', space=sflag, size = 0x4, scoped, tag = 'scoped memory for tpu_custom_call.1']
    #allocation7 [shape = 's32[1]{0}', space=sflag, size = 0x4, scoped, tag = 'scoped memory for tpu_custom_call.1']
    #allocation8 [shape = 'u8[512]{0}', space=smem, size = 0x200, scoped, tag = 'input window, operand 1, single buffered']
    #allocation9 [shape = 'u8[1024]{0}', space=vmem, size = 0x400, scoped, tag = 'input window, operand 2, single buffered']
    #allocation10 [shape = 's32[1]{0}', space=sflag, size = 0x4, scoped, tag = 'scoped memory for tpu_custom_call.1']
    #allocation11 [shape = 'u8[2048]{0}', space=vmem, size = 0x800, scoped, tag = 'output window, operand 0, single buffered']
    %8 = vsyncpa [#allocation5], 0
    %9 = vsyncpa [#allocation7], 0
    %10 = vsyncpa [#allocation10], 0
    %11 = vsyncpa [#allocation6], 0
    // Predicated region
    $region2: #{tpu_custom_call.1} parent=1 // pred_check
      _
    $region3: #{tpu_custom_call.1} parent=1 // pred_check_branch
      %13 = sbr.rel (0) target = $region5
    $region4: #{tpu_custom_call.1} parent=1 // pred_region
      %15 = vsyncadd [#allocation5], 0
      %s16 = sshll.u32 %s0, 4
      %s17 = int_to_ptr.hbm [resolvable:$true] %s16
      %s18 = sshll.u32 [#allocation4], 4
      %s19 = int_to_ptr.vmem [resolvable:$true] %s18
      %24 = dma.hbm_to_vmem [thread:$0]  %s17, 256, %s19, [#allocation5], 128, 128, 8
    $region5: #{tpu_custom_call.1} parent=1 // pred_fallthru
      _
    // Predicated region
    $region6: #{tpu_custom_call.1} parent=1 // pred_check
      _
    $region7: #{tpu_custom_call.1} parent=1 // pred_check_branch
      %26 = sbr.rel (0) target = $region9
    $region8: #{tpu_custom_call.1} parent=1 // pred_region
      %28 = vsyncadd [#allocation7], 0
      %s30 = sshll.u32 %s1, 4
      %s31 = int_to_ptr.hbm [resolvable:$true] %s30
      %33 = dma.hbm_to_smem %s31, 16, [#allocation8], [#allocation7]
    $region9: #{tpu_custom_call.1} parent=1 // pred_fallthru
      _
    // Predicated region
    $region10: #{tpu_custom_call.1} parent=1 // pred_check
      _
    $region11: #{tpu_custom_call.1} parent=1 // pred_check_branch
      %35 = sbr.rel (0) target = $region13
    $region12: #{tpu_custom_call.1} parent=1 // pred_region
      %37 = vsyncadd [#allocation10], 0
      %s39 = sshll.u32 %s2, 4
      %s40 = int_to_ptr.hbm [resolvable:$true] %s39
      %s41 = sshll.u32 [#allocation9], 4
      %s42 = int_to_ptr.vmem [resolvable:$true] %s41
      %44 = dma.hbm_to_vmem [thread:$0]  %s40, 32, %s42, [#allocation10]
    $region13: #{tpu_custom_call.1} parent=1 // pred_fallthru
      _
    // Predicated region
    $region14: #{tpu_custom_call.1} parent=1 // pred_check
      _
    $region15: #{tpu_custom_call.1} parent=1 // pred_check_branch
      %46 = sbr.rel (0) target = $region17
    $region16: #{tpu_custom_call.1} parent=1 // pred_region
      %48 = dma.done [#allocation5], 256
    $region17: #{tpu_custom_call.1} parent=1 // pred_fallthru
      _
    // Predicated region
    $region18: #{tpu_custom_call.1} parent=1 // pred_check
      _
    $region19: #{tpu_custom_call.1} parent=1 // pred_check_branch
      %50 = sbr.rel (0) target = $region21
    $region20: #{tpu_custom_call.1} parent=1 // pred_region
      %52 = dma.done [#allocation7], 16
    $region21: #{tpu_custom_call.1} parent=1 // pred_fallthru
      _
    // Predicated region
    $region22: #{tpu_custom_call.1} parent=1 // pred_check
      _
    $region23: #{tpu_custom_call.1} parent=1 // pred_check_branch
      %54 = sbr.rel (0) target = $region25
    $region24: #{tpu_custom_call.1} parent=1 // pred_region
      %56 = dma.done [#allocation10], 32
    $region25: #{tpu_custom_call.1} parent=1 // pred_fallthru
      _
    %57 = sfence
    %v58 = vld [vmem:[#allocation4] sm:$0xff]
    %v59 = vld [vmem:[#allocation4 + $0x8] sm:$0xff]
    %62 = vst [vmem:[#allocation1] ss:$2 sm:$0xff] %v58
    %v63 = vld.sshfl [vmem:[#allocation1] sm:$0xff pattern:$0x75316420]
    %v64 = vld.sshfl [vmem:[#allocation1 + $0x8] sm:$0xff pattern:$0x75316420]
    %s65 = scalar_lea.vmem [#allocation1], 16
    %66 = vst [vmem:[%s65] ss:$2 sm:$0xff] %v59
    %v67 = vld.sshfl [vmem:[#allocation1 + $0x10] sm:$0xff pattern:$0x75316420]
    %v68 = vld.sshfl [vmem:[#allocation1 + $0x18] sm:$0xff pattern:$0x75316420]
    %vm73 = vcmask 1043456
    %v74 = vsel %vm73, %v63, 0.0
    %v75 = vrot.slane %v74, 4
    %v76 = vadd.f32 %v74, %v75
    %v77 = vrot.slane %v76, 2
    %v78 = vadd.f32 %v76, %v77
    %v79 = vrot.slane %v78, 1
    %v80 = vadd.f32 %v78, %v79
    %v81 = vsel %vm73, %v64, 0.0
    %v82 = vrot.slane %v81, 4
    %v83 = vadd.f32 %v81, %v82
    %v84 = vrot.slane %v83, 2
    %v85 = vadd.f32 %v83, %v84
    %v86 = vrot.slane %v85, 1
    %v87 = vadd.f32 %v85, %v86
    %v88 = vsel %vm73, %v67, 0.0
    %v89 = vrot.slane %v88, 4
    %v90 = vadd.f32 %v88, %v89
    %v91 = vrot.slane %v90, 2
    %v92 = vadd.f32 %v90, %v91
    %v93 = vrot.slane %v92, 1
    %v94 = vadd.f32 %v92, %v93
    %v95 = vsel %vm73, %v68, 0.0
    %v96 = vrot.slane %v95, 4
    %v97 = vadd.f32 %v95, %v96
    %v98 = vrot.slane %v97, 2
    %v99 = vadd.f32 %v97, %v98
    %v100 = vrot.slane %v99, 1
    %v101 = vadd.f32 %v99, %v100
    %102 = vst [vmem:[#allocation1] ss:$2 sm:$0xff] %v58
    %v103 = vld.sshfl [vmem:[#allocation1] sm:$0xff pattern:$0x75316420]
    %v104 = vld.sshfl [vmem:[#allocation1 + $0x8] sm:$0xff pattern:$0x75316420]
    %s105 = scalar_lea.vmem [#allocation1], 16
    %106 = vst [vmem:[%s105] ss:$2 sm:$0xff] %v59
    %v107 = vld.sshfl [vmem:[#allocation1 + $0x10] sm:$0xff pattern:$0x75316420]
    %v108 = vld.sshfl [vmem:[#allocation1 + $0x18] sm:$0xff pattern:$0x75316420]
    %v113 = vsel %vm73, %v103, -inf
    %v114 = vrot.slane %v113, 4
    %v115 = vmax.f32 %v113, %v114
    %v116 = vrot.slane %v115, 2
    %v117 = vmax.f32 %v115, %v116
    %v118 = vrot.slane %v117, 1
    %v119 = vmax.f32 %v117, %v118
    %v120 = vsel %vm73, %v104, -inf
    %v121 = vrot.slane %v120, 4
    %v122 = vmax.f32 %v120, %v121
    %v123 = vrot.slane %v122, 2
    %v124 = vmax.f32 %v122, %v123
    %v125 = vrot.slane %v124, 1
    %v126 = vmax.f32 %v124, %v125
    %v127 = vsel %vm73, %v107, -inf
    %v128 = vrot.slane %v127, 4
    %v129 = vmax.f32 %v127, %v128
    %v130 = vrot.slane %v129, 2
    %v131 = vmax.f32 %v129, %v130
    %v132 = vrot.slane %v131, 1
    %v133 = vmax.f32 %v131, %v132
    %v134 = vsel %vm73, %v108, -inf
    %v135 = vrot.slane %v134, 4
    %v136 = vmax.f32 %v134, %v135
    %v137 = vrot.slane %v136, 2
    %v138 = vmax.f32 %v136, %v137
    %v139 = vrot.slane %v138, 1
    %v140 = vmax.f32 %v138, %v139
    %p141 = scmp.eq.s32.totalorder 0, 0
    // Predicated region
    $region26: #{tpu_custom_call.1} parent=1 // pred_check
      %p142 = pneg %p141
    $region27: #{tpu_custom_call.1} parent=1 // pred_check_branch
      %144 = sbr.rel (%p142) target = $region29
    $region28: #{tpu_custom_call.1} parent=1 // pred_region
      %145 = vst [vmem:[#allocation2] sm:$0xf] 0.0
      %146 = vst [vmem:[#allocation3] sm:$0xf] -inf
    $region29: #{tpu_custom_call.1} parent=1 // pred_fallthru
      _
    %v147 = vld [vmem:[#allocation2] sm:$0xf]
    %v152 = vrot.slane %v87, 6
    %v153 = vrot.slane %v101, 6
    %vm154 = vcmask 1041408
    %v155 = vsel %vm154, %v80, %v152
    %v156 = vsel %vm154, %v94, %v153
    %vm157 = vcmask 1044484
    %v158 = vsel %vm157, %v155, %v155
    %vm159 = vcmask 1046534
    %v160 = vsel %vm159, %v155, %v158
    %v161 = vrot.slane %v156, 7
    %vm162 = vcmask 1041409
    %v163 = vsel %vm162, %v161, %v160
    %vm164 = vcmask 1043459
    %v165 = vsel %vm164, %v161, %v163
    %vm166 = vcmask 1045509
    %v167 = vsel %vm166, %v161, %v165
    %vm168 = vcmask 1047559
    %v169 = vsel %vm168, %v161, %v167
    %v171 = vadd.f32 %v147, %v169
    %172 = vst [vmem:[#allocation2] sm:$0xf] %v171
    %v173 = vld [vmem:[#allocation3] sm:$0xf]
    %v178 = vrot.slane %v126, 6
    %v179 = vrot.slane %v140, 6
    %v180 = vsel %vm154, %v119, %v178
    %v181 = vsel %vm154, %v133, %v179
    %v182 = vsel %vm157, %v180, %v180
    %v183 = vsel %vm159, %v180, %v182
    %v184 = vrot.slane %v181, 7
    %v185 = vsel %vm162, %v184, %v183
    %v186 = vsel %vm164, %v184, %v185
    %v187 = vsel %vm166, %v184, %v186
    %v188 = vsel %vm168, %v184, %v187
    %v190 = vmax.f32 %v173, %v188
    %191 = vst [vmem:[#allocation3] sm:$0xf] %v190
    // Predicated region
    $region30: #{tpu_custom_call.1} parent=1 // pred_check
      %p192 = pneg %p141
    $region31: #{tpu_custom_call.1} parent=1 // pred_check_branch
      %194 = sbr.rel (%p192) target = $region33
    $region32: #{tpu_custom_call.1} parent=1 // pred_region
      %v195 = vld [vmem:[#allocation2] sm:$0xf]
      %v196 = vmul.f32 %v195, 0.25
      %v197 = vld [vmem:[#allocation3] sm:$0xf]
      %v198 = vld [vmem:[#allocation9] sm:$0x3]
      %200 = vst [vmem:[#allocation1] ss:$4 sm:$0xff] %v196
      %v201 = vld.sshfl [vmem:[#allocation1] sm:$0xff pattern:$0x73625140]
      %v202 = vld.sshfl [vmem:[#allocation1 + $0x8] sm:$0xff pattern:$0x73625140]
      %203 = vrot.lane.b32.xlu0 %v201, 3
      %v204 = vpop.permute.xlu0 %203
      %205 = vrot.lane.b32.xlu0 %v202, 3
      %v206 = vpop.permute.xlu0 %205
      %vm207 = vcmask 23552
      %v208 = vsel %vm207, %v204, %v206
      %v211 = vsel %vm207, 0.0, %v204
      %vm212 = vcmp.ge.s32.totalorder %v198, 3
      %v213 = vsel %vm212, 1, 0
      %v214 = vperm.slane %v213, 0
      %v215 = vperm.slane %v213, 1
      %vm216 = vcmp.eq.s32.totalorder %v214, 1
      %vm217 = vcmp.eq.s32.totalorder %v215, 1
      %v218 = vsel %vm216, %v211, 0.0
      %v219 = vsel %vm217, %v208, 0.0
      %220 = vst [vmem:[#allocation1] ss:$4 sm:$0xff] %v196
      %v221 = vld.sshfl [vmem:[#allocation1] sm:$0xff pattern:$0x73625140]
      %v222 = vld.sshfl [vmem:[#allocation1 + $0x8] sm:$0xff pattern:$0x73625140]
      %223 = vrot.lane.b32.xlu0 %v221, 2
      %v224 = vpop.permute.xlu0 %223
      %225 = vrot.lane.b32.xlu0 %v222, 2
      %v226 = vpop.permute.xlu0 %225
      %vm227 = vcmask 15360
      %v228 = vsel %vm227, %v224, %v226
      %v231 = vsel %vm227, 0.0, %v224
      %vm232 = vcmp.ge.s32.totalorder %v198, 2
      %v233 = vsel %vm232, 1, 0
      %v234 = vperm.slane %v233, 0
      %v235 = vperm.slane %v233, 1
      %vm236 = vcmp.eq.s32.totalorder %v234, 1
      %vm237 = vcmp.eq.s32.totalorder %v235, 1
      %v238 = vsel %vm236, %v231, 0.0
      %v239 = vsel %vm237, %v228, 0.0
      %240 = vst [vmem:[#allocation1] ss:$4 sm:$0xff] %v196
      %v241 = vld.sshfl [vmem:[#allocation1] sm:$0xff pattern:$0x73625140]
      %v242 = vld.sshfl [vmem:[#allocation1 + $0x8] sm:$0xff pattern:$0x73625140]
      %243 = vrot.lane.b32.xlu0 %v241, 1
      %v244 = vpop.permute.xlu0 %243
      %245 = vrot.lane.b32.xlu0 %v242, 1
      %v246 = vpop.permute.xlu0 %245
      %vm247 = vcmask 7168
      %v248 = vsel %vm247, %v244, %v246
      %v251 = vsel %vm247, 0.0, %v244
      %vm252 = vcmp.ge.s32.totalorder %v198, 1
      %v253 = vsel %vm252, 1, 0
      %v254 = vperm.slane %v253, 0
      %v255 = vperm.slane %v253, 1
      %vm256 = vcmp.eq.s32.totalorder %v254, 1
      %vm257 = vcmp.eq.s32.totalorder %v255, 1
      %v258 = vsel %vm256, %v251, 0.0
      %v259 = vsel %vm257, %v248, 0.0
      %260 = vst [vmem:[#allocation1] ss:$4 sm:$0xff] %v196
      %v261 = vld.sshfl [vmem:[#allocation1] sm:$0xff pattern:$0x73625140]
      %v262 = vld.sshfl [vmem:[#allocation1 + $0x8] sm:$0xff pattern:$0x73625140]
      %263 = vrot.lane.b32.xlu0 %v261, 127
      %v264 = vpop.permute.xlu0 %263
      %265 = vrot.lane.b32.xlu0 %v262, 127
      %v266 = vpop.permute.xlu0 %265
      %vm267 = vcmask 1039360
      %v268 = vsel %vm267, %v264, %v266
      %v271 = vsel %vm267, %v266, 0.0
      %vm272 = vcmp.lt.s32.totalorder %v198, 15
      %v273 = vsel %vm272, 1, 0
      %v274 = vperm.slane %v273, 0
      %v275 = vperm.slane %v273, 1
      %vm276 = vcmp.eq.s32.totalorder %v274, 1
      %vm277 = vcmp.eq.s32.totalorder %v275, 1
      %v278 = vsel %vm276, %v268, 0.0
      %v279 = vsel %vm277, %v271, 0.0
      %280 = vst [vmem:[#allocation1] ss:$4 sm:$0xff] %v196
      %v281 = vld.sshfl [vmem:[#allocation1] sm:$0xff pattern:$0x73625140]
      %v282 = vld.sshfl [vmem:[#allocation1 + $0x8] sm:$0xff pattern:$0x73625140]
      %283 = vrot.lane.b32.xlu0 %v281, 126
      %v284 = vpop.permute.xlu0 %283
      %285 = vrot.lane.b32.xlu0 %v282, 126
      %v286 = vpop.permute.xlu0 %285
      %vm287 = vcmask 1031168
      %v288 = vsel %vm287, %v284, %v286
      %v291 = vsel %vm287, %v286, 0.0
      %vm292 = vcmp.lt.s32.totalorder %v198, 14
      %v293 = vsel %vm292, 1, 0
      %v294 = vperm.slane %v293, 0
      %v295 = vperm.slane %v293, 1
      %vm296 = vcmp.eq.s32.totalorder %v294, 1
      %vm297 = vcmp.eq.s32.totalorder %v295, 1
      %v298 = vsel %vm296, %v288, 0.0
      %v299 = vsel %vm297, %v291, 0.0
      %300 = vst [vmem:[#allocation1] ss:$4 sm:$0xff] %v196
      %v301 = vld.sshfl [vmem:[#allocation1] sm:$0xff pattern:$0x73625140]
      %v302 = vld.sshfl [vmem:[#allocation1 + $0x8] sm:$0xff pattern:$0x73625140]
      %303 = vrot.lane.b32.xlu0 %v301, 125
      %v304 = vpop.permute.xlu0 %303
      %305 = vrot.lane.b32.xlu0 %v302, 125
      %v306 = vpop.permute.xlu0 %305
      %vm307 = vcmask 1022976
      %v308 = vsel %vm307, %v304, %v306
      %v311 = vsel %vm307, %v306, 0.0
      %vm312 = vcmp.lt.s32.totalorder %v198, 13
      %v313 = vsel %vm312, 1, 0
      %v314 = vperm.slane %v313, 0
      %v315 = vperm.slane %v313, 1
      %vm316 = vcmp.eq.s32.totalorder %v314, 1
      %vm317 = vcmp.eq.s32.totalorder %v315, 1
      %v318 = vsel %vm316, %v308, 0.0
      %v319 = vsel %vm317, %v311, 0.0
      %s320 = sld [smem:[#allocation8]]
      %v321 = vstv %s320
      %v322 = vmul.f32 %v218, %v321
      %v323 = vmul.f32 %v219, %v321
      %s324 = sld [smem:[#allocation8 + $0x1]]
      %v325 = vstv %s324
      %v326 = vmul.f32 %v238, %v325
      %v327 = vmul.f32 %v239, %v325
      %v328 = vadd.f32 %v322, %v326
      %v329 = vadd.f32 %v323, %v327
      %s330 = sld [smem:[#allocation8 + $0x2]]
      %v331 = vstv %s330
      %v332 = vmul.f32 %v258, %v331
      %v333 = vmul.f32 %v259, %v331
      %v334 = vadd.f32 %v328, %v332
      %v335 = vadd.f32 %v329, %v333
      %s336 = sld [smem:[#allocation8 + $0x3]]
      %v337 = vstv %s336
      %v338 = vmul.f32 %v196, %v337
      %340 = vst [vmem:[#allocation1] ss:$4 sm:$0xff] %v338
      %v341 = vld.sshfl [vmem:[#allocation1] sm:$0xff pattern:$0x73625140]
      %v342 = vld.sshfl [vmem:[#allocation1 + $0x8] sm:$0xff pattern:$0x73625140]
      %v345 = vadd.f32 %v334, %v341
      %v346 = vadd.f32 %v335, %v342
      %s347 = sld [smem:[#allocation8 + $0x4]]
      %v348 = vstv %s347
      %v349 = vmul.f32 %v278, %v348
      %v350 = vmul.f32 %v279, %v348
      %v351 = vadd.f32 %v345, %v349
      %v352 = vadd.f32 %v346, %v350
      %s353 = sld [smem:[#allocation8 + $0x5]]
      %v354 = vstv %s353
      %v355 = vmul.f32 %v298, %v354
      %v356 = vmul.f32 %v299, %v354
      %v357 = vadd.f32 %v351, %v355
      %v358 = vadd.f32 %v352, %v356
      %s359 = sld [smem:[#allocation8 + $0x6]]
      %v360 = vstv %s359
      %v361 = vmul.f32 %v318, %v360
      %v362 = vmul.f32 %v319, %v360
      %v363 = vadd.f32 %v357, %v361
      %v364 = vadd.f32 %v358, %v362
      %367 = vrot.lane.b32.xlu0 %v363, 48
      %v368 = vpop.permute.xlu0 %367
      %369 = vrot.lane.b32.xlu0 %v364, 48
      %v370 = vpop.permute.xlu0 %369
      %vm371 = vcmask 392192
      %v372 = vsel %vm371, %v368, %v370
      %v375 = vsel %vm371, 0.0, %v368
      %v376 = vadd.f32 %v375, 0.0
      %v377 = vadd.f32 %v372, 0.0
      %s378 = sld [smem:[#allocation8 + $0x7]]
      %v379 = vstv %s378
      %v380 = vmul.f32 %v218, %v379
      %v381 = vmul.f32 %v219, %v379
      %s382 = sld [smem:[#allocation8 + $0x8]]
      %v383 = vstv %s382
      %v384 = vmul.f32 %v238, %v383
      %v385 = vmul.f32 %v239, %v383
      %v386 = vadd.f32 %v380, %v384
      %v387 = vadd.f32 %v381, %v385
      %s388 = sld [smem:[#allocation8 + $0x9]]
      %v389 = vstv %s388
      %v390 = vmul.f32 %v258, %v389
      %v391 = vmul.f32 %v259, %v389
      %v392 = vadd.f32 %v386, %v390
      %v393 = vadd.f32 %v387, %v391
      %s394 = sld [smem:[#allocation8 + $0xa]]
      %v395 = vstv %s394
      %v396 = vmul.f32 %v196, %v395
      %398 = vst [vmem:[#allocation1] ss:$4 sm:$0xff] %v396
      %v399 = vld.sshfl [vmem:[#allocation1] sm:$0xff pattern:$0x73625140]
      %v400 = vld.sshfl [vmem:[#allocation1 + $0x8] sm:$0xff pattern:$0x73625140]
      %v403 = vadd.f32 %v392, %v399
      %v404 = vadd.f32 %v393, %v400
      %s405 = sld [smem:[#allocation8 + $0xb]]
      %v406 = vstv %s405
      %v407 = vmul.f32 %v278, %v406
      %v408 = vmul.f32 %v279, %v406
      %v409 = vadd.f32 %v403, %v407
      %v410 = vadd.f32 %v404, %v408
      %s411 = sld [smem:[#allocation8 + $0xc]]
      %v412 = vstv %s411
      %v413 = vmul.f32 %v298, %v412
      %v414 = vmul.f32 %v299, %v412
      %v415 = vadd.f32 %v409, %v413
      %v416 = vadd.f32 %v410, %v414
      %s417 = sld [smem:[#allocation8 + $0xd]]
      %v418 = vstv %s417
      %v419 = vmul.f32 %v318, %v418
      %v420 = vmul.f32 %v319, %v418
      %v421 = vadd.f32 %v415, %v419
      %v422 = vadd.f32 %v416, %v420
      %425 = vrot.lane.b32.xlu0 %v421, 32
      %v426 = vpop.permute.xlu0 %425
      %427 = vrot.lane.b32.xlu0 %v422, 32
      %v428 = vpop.permute.xlu0 %427
      %vm429 = vcmask 261120
      %v430 = vsel %vm429, %v426, %v428
      %v433 = vsel %vm429, 0.0, %v426
      %v434 = vadd.f32 %v376, %v433
      %v435 = vadd.f32 %v377, %v430
      %s436 = sld [smem:[#allocation8 + $0xe]]
      %v437 = vstv %s436
      %v438 = vmul.f32 %v218, %v437
      %v439 = vmul.f32 %v219, %v437
      %s440 = sld [smem:[#allocation8 + $0xf]]
      %v441 = vstv %s440
      %v442 = vmul.f32 %v238, %v441
      %v443 = vmul.f32 %v239, %v441
      %v444 = vadd.f32 %v438, %v442
      %v445 = vadd.f32 %v439, %v443
      %s446 = sld [smem:[#allocation8 + $0x10]]
      %v447 = vstv %s446
      %v448 = vmul.f32 %v258, %v447
      %v449 = vmul.f32 %v259, %v447
      %v450 = vadd.f32 %v444, %v448
      %v451 = vadd.f32 %v445, %v449
      %s452 = sld [smem:[#allocation8 + $0x11]]
      %v453 = vstv %s452
      %v454 = vmul.f32 %v196, %v453
      %456 = vst [vmem:[#allocation1] ss:$4 sm:$0xff] %v454
      %v457 = vld.sshfl [vmem:[#allocation1] sm:$0xff pattern:$0x73625140]
      %v458 = vld.sshfl [vmem:[#allocation1 + $0x8] sm:$0xff pattern:$0x73625140]
      %v461 = vadd.f32 %v450, %v457
      %v462 = vadd.f32 %v451, %v458
      %s463 = sld [smem:[#allocation8 + $0x12]]
      %v464 = vstv %s463
      %v465 = vmul.f32 %v278, %v464
      %v466 = vmul.f32 %v279, %v464
      %v467 = vadd.f32 %v461, %v465
      %v468 = vadd.f32 %v462, %v466
      %s469 = sld [smem:[#allocation8 + $0x13]]
      %v470 = vstv %s469
      %v471 = vmul.f32 %v298, %v470
      %v472 = vmul.f32 %v299, %v470
      %v473 = vadd.f32 %v467, %v471
      %v474 = vadd.f32 %v468, %v472
      %s475 = sld [smem:[#allocation8 + $0x14]]
      %v476 = vstv %s475
      %v477 = vmul.f32 %v318, %v476
      %v478 = vmul.f32 %v319, %v476
      %v479 = vadd.f32 %v473, %v477
      %v480 = vadd.f32 %v474, %v478
      %483 = vrot.lane.b32.xlu0 %v479, 16
      %v484 = vpop.permute.xlu0 %483
      %485 = vrot.lane.b32.xlu0 %v480, 16
      %v486 = vpop.permute.xlu0 %485
      %vm487 = vcmask 130048
      %v488 = vsel %vm487, %v484, %v486
      %v491 = vsel %vm487, 0.0, %v484
      %v492 = vadd.f32 %v434, %v491
      %v493 = vadd.f32 %v435, %v488
      %s494 = sld [smem:[#allocation8 + $0x15]]
      %v495 = vstv %s494
      %v496 = vmul.f32 %v218, %v495
      %v497 = vmul.f32 %v219, %v495
      %s498 = sld [smem:[#allocation8 + $0x16]]
      %v499 = vstv %s498
      %v500 = vmul.f32 %v238, %v499
      %v501 = vmul.f32 %v239, %v499
      %v502 = vadd.f32 %v496, %v500
      %v503 = vadd.f32 %v497, %v501
      %s504 = sld [smem:[#allocation8 + $0x17]]
      %v505 = vstv %s504
      %v506 = vmul.f32 %v258, %v505
      %v507 = vmul.f32 %v259, %v505
      %v508 = vadd.f32 %v502, %v506
      %v509 = vadd.f32 %v503, %v507
      %s510 = sld [smem:[#allocation8 + $0x18]]
      %v511 = vstv %s510
      %v512 = vmul.f32 %v196, %v511
      %514 = vst [vmem:[#allocation1] ss:$4 sm:$0xff] %v512
      %v515 = vld.sshfl [vmem:[#allocation1] sm:$0xff pattern:$0x73625140]
      %v516 = vld.sshfl [vmem:[#allocation1 + $0x8] sm:$0xff pattern:$0x73625140]
      %v519 = vadd.f32 %v508, %v515
      %v520 = vadd.f32 %v509, %v516
      %s521 = sld [smem:[#allocation8 + $0x19]]
      %v522 = vstv %s521
      %v523 = vmul.f32 %v278, %v522
      %v524 = vmul.f32 %v279, %v522
      %v525 = vadd.f32 %v519, %v523
      %v526 = vadd.f32 %v520, %v524
      %s527 = sld [smem:[#allocation8 + $0x1a]]
      %v528 = vstv %s527
      %v529 = vmul.f32 %v298, %v528
      %v530 = vmul.f32 %v299, %v528
      %v531 = vadd.f32 %v525, %v529
      %v532 = vadd.f32 %v526, %v530
      %s533 = sld [smem:[#allocation8 + $0x1b]]
      %v534 = vstv %s533
      %v535 = vmul.f32 %v318, %v534
      %v536 = vmul.f32 %v319, %v534
      %v537 = vadd.f32 %v531, %v535
      %v538 = vadd.f32 %v532, %v536
      %v539 = vadd.f32 %v492, %v537
      %v540 = vadd.f32 %v493, %v538
      %s541 = sld [smem:[#allocation8 + $0x1c]]
      %v542 = vstv %s541
      %v543 = vmul.f32 %v218, %v542
      %v544 = vmul.f32 %v219, %v542
      %s545 = sld [smem:[#allocation8 + $0x1d]]
      %v546 = vstv %s545
      %v547 = vmul.f32 %v238, %v546
      %v548 = vmul.f32 %v239, %v546
      %v549 = vadd.f32 %v543, %v547
      %v550 = vadd.f32 %v544, %v548
      %s551 = sld [smem:[#allocation8 + $0x1e]]
      %v552 = vstv %s551
      %v553 = vmul.f32 %v258, %v552
      %v554 = vmul.f32 %v259, %v552
      %v555 = vadd.f32 %v549, %v553
      %v556 = vadd.f32 %v550, %v554
      %s557 = sld [smem:[#allocation8 + $0x1f]]
      %v558 = vstv %s557
      %v559 = vmul.f32 %v196, %v558
      %561 = vst [vmem:[#allocation1] ss:$4 sm:$0xff] %v559
      %v562 = vld.sshfl [vmem:[#allocation1] sm:$0xff pattern:$0x73625140]
      %v563 = vld.sshfl [vmem:[#allocation1 + $0x8] sm:$0xff pattern:$0x73625140]
      %v566 = vadd.f32 %v555, %v562
      %v567 = vadd.f32 %v556, %v563
      %s568 = sld [smem:[#allocation8 + $0x20]]
      %v569 = vstv %s568
      %v570 = vmul.f32 %v278, %v569
      %v571 = vmul.f32 %v279, %v569
      %v572 = vadd.f32 %v566, %v570
      %v573 = vadd.f32 %v567, %v571
      %s574 = sld [smem:[#allocation8 + $0x21]]
      %v575 = vstv %s574
      %v576 = vmul.f32 %v298, %v575
      %v577 = vmul.f32 %v299, %v575
      %v578 = vadd.f32 %v572, %v576
      %v579 = vadd.f32 %v573, %v577
      %s580 = sld [smem:[#allocation8 + $0x22]]
      %v581 = vstv %s580
      %v582 = vmul.f32 %v318, %v581
      %v583 = vmul.f32 %v319, %v581
      %v584 = vadd.f32 %v578, %v582
      %v585 = vadd.f32 %v579, %v583
      %588 = vrot.lane.b32.xlu0 %v584, 112
      %v589 = vpop.permute.xlu0 %588
      %590 = vrot.lane.b32.xlu0 %v585, 112
      %v591 = vpop.permute.xlu0 %590
      %vm592 = vcmask 916480
      %v593 = vsel %vm592, %v589, %v591
      %v596 = vsel %vm592, %v591, 0.0
      %v597 = vadd.f32 %v539, %v593
      %v598 = vadd.f32 %v540, %v596
      %s599 = sld [smem:[#allocation8 + $0x23]]
      %v600 = vstv %s599
      %v601 = vmul.f32 %v218, %v600
      %v602 = vmul.f32 %v219, %v600
      %s603 = sld [smem:[#allocation8 + $0x24]]
      %v604 = vstv %s603
      %v605 = vmul.f32 %v238, %v604
      %v606 = vmul.f32 %v239, %v604
      %v607 = vadd.f32 %v601, %v605
      %v608 = vadd.f32 %v602, %v606
      %s609 = sld [smem:[#allocation8 + $0x25]]
      %v610 = vstv %s609
      %v611 = vmul.f32 %v258, %v610
      %v612 = vmul.f32 %v259, %v610
      %v613 = vadd.f32 %v607, %v611
      %v614 = vadd.f32 %v608, %v612
      %s615 = sld [smem:[#allocation8 + $0x26]]
      %v616 = vstv %s615
      %v617 = vmul.f32 %v196, %v616
      %619 = vst [vmem:[#allocation1] ss:$4 sm:$0xff] %v617
      %v620 = vld.sshfl [vmem:[#allocation1] sm:$0xff pattern:$0x73625140]
      %v621 = vld.sshfl [vmem:[#allocation1 + $0x8] sm:$0xff pattern:$0x73625140]
      %v624 = vadd.f32 %v613, %v620
      %v625 = vadd.f32 %v614, %v621
      %s626 = sld [smem:[#allocation8 + $0x27]]
      %v627 = vstv %s626
      %v628 = vmul.f32 %v278, %v627
      %v629 = vmul.f32 %v279, %v627
      %v630 = vadd.f32 %v624, %v628
      %v631 = vadd.f32 %v625, %v629
      %s632 = sld [smem:[#allocation8 + $0x28]]
      %v633 = vstv %s632
      %v634 = vmul.f32 %v298, %v633
      %v635 = vmul.f32 %v299, %v633
      %v636 = vadd.f32 %v630, %v634
      %v637 = vadd.f32 %v631, %v635
      %s638 = sld [smem:[#allocation8 + $0x29]]
      %v639 = vstv %s638
      %v640 = vmul.f32 %v318, %v639
      %v641 = vmul.f32 %v319, %v639
      %v642 = vadd.f32 %v636, %v640
      %v643 = vadd.f32 %v637, %v641
      %646 = vrot.lane.b32.xlu0 %v642, 96
      %v647 = vpop.permute.xlu0 %646
      %648 = vrot.lane.b32.xlu0 %v643, 96
      %v649 = vpop.permute.xlu0 %648
      %vm650 = vcmask 785408
      %v651 = vsel %vm650, %v647, %v649
      %v654 = vsel %vm650, %v649, 0.0
      %v655 = vadd.f32 %v597, %v651
      %v656 = vadd.f32 %v598, %v654
      %s657 = sld [smem:[#allocation8 + $0x2a]]
      %v658 = vstv %s657
      %v659 = vmul.f32 %v218, %v658
      %v660 = vmul.f32 %v219, %v658
      %s661 = sld [smem:[#allocation8 + $0x2b]]
      %v662 = vstv %s661
      %v663 = vmul.f32 %v238, %v662
      %v664 = vmul.f32 %v239, %v662
      %v665 = vadd.f32 %v659, %v663
      %v666 = vadd.f32 %v660, %v664
      %s667 = sld [smem:[#allocation8 + $0x2c]]
      %v668 = vstv %s667
      %v669 = vmul.f32 %v258, %v668
      %v670 = vmul.f32 %v259, %v668
      %v671 = vadd.f32 %v665, %v669
      %v672 = vadd.f32 %v666, %v670
      %s673 = sld [smem:[#allocation8 + $0x2d]]
      %v674 = vstv %s673
      %v675 = vmul.f32 %v196, %v674
      %677 = vst [vmem:[#allocation1] ss:$4 sm:$0xff] %v675
      %v678 = vld.sshfl [vmem:[#allocation1] sm:$0xff pattern:$0x73625140]
      %v679 = vld.sshfl [vmem:[#allocation1 + $0x8] sm:$0xff pattern:$0x73625140]
      %v682 = vadd.f32 %v671, %v678
      %v683 = vadd.f32 %v672, %v679
      %s684 = sld [smem:[#allocation8 + $0x2e]]
      %v685 = vstv %s684
      %v686 = vmul.f32 %v278, %v685
      %v687 = vmul.f32 %v279, %v685
      %v688 = vadd.f32 %v682, %v686
      %v689 = vadd.f32 %v683, %v687
      %s690 = sld [smem:[#allocation8 + $0x2f]]
      %v691 = vstv %s690
      %v692 = vmul.f32 %v298, %v691
      %v693 = vmul.f32 %v299, %v691
      %v694 = vadd.f32 %v688, %v692
      %v695 = vadd.f32 %v689, %v693
      %s696 = sld [smem:[#allocation8 + $0x30]]
      %v697 = vstv %s696
      %v698 = vmul.f32 %v318, %v697
      %v699 = vmul.f32 %v319, %v697
      %v700 = vadd.f32 %v694, %v698
      %v701 = vadd.f32 %v695, %v699
      %704 = vrot.lane.b32.xlu0 %v700, 80
      %v705 = vpop.permute.xlu0 %704
      %706 = vrot.lane.b32.xlu0 %v701, 80
      %v707 = vpop.permute.xlu0 %706
      %vm708 = vcmask 654336
      %v709 = vsel %vm708, %v705, %v707
      %v712 = vsel %vm708, %v707, 0.0
      %v713 = vadd.f32 %v655, %v709
      %v714 = vadd.f32 %v656, %v712
      %716 = vst [vmem:[#allocation1] ss:$4 sm:$0xff] %v197
      %v717 = vld.sshfl [vmem:[#allocation1] sm:$0xff pattern:$0x73625140]
      %v718 = vld.sshfl [vmem:[#allocation1 + $0x8] sm:$0xff pattern:$0x73625140]
      %719 = vrot.lane.b32.xlu0 %v717, 3
      %v720 = vpop.permute.xlu0 %719
      %721 = vrot.lane.b32.xlu0 %v718, 3
      %v722 = vpop.permute.xlu0 %721
      %v723 = vsel %vm207, %v720, %v722
      %v726 = vsel %vm207, 0.0, %v720
      %v727 = vsel %vm216, %v726, 0.0
      %v728 = vsel %vm217, %v723, 0.0
      %729 = vst [vmem:[#allocation1] ss:$4 sm:$0xff] %v197
      %v730 = vld.sshfl [vmem:[#allocation1] sm:$0xff pattern:$0x73625140]
      %v731 = vld.sshfl [vmem:[#allocation1 + $0x8] sm:$0xff pattern:$0x73625140]
      %732 = vrot.lane.b32.xlu0 %v730, 2
      %v733 = vpop.permute.xlu0 %732
      %734 = vrot.lane.b32.xlu0 %v731, 2
      %v735 = vpop.permute.xlu0 %734
      %v736 = vsel %vm227, %v733, %v735
      %v739 = vsel %vm227, 0.0, %v733
      %v740 = vsel %vm236, %v739, 0.0
      %v741 = vsel %vm237, %v736, 0.0
      %742 = vst [vmem:[#allocation1] ss:$4 sm:$0xff] %v197
      %v743 = vld.sshfl [vmem:[#allocation1] sm:$0xff pattern:$0x73625140]
      %v744 = vld.sshfl [vmem:[#allocation1 + $0x8] sm:$0xff pattern:$0x73625140]
      %745 = vrot.lane.b32.xlu0 %v743, 1
      %v746 = vpop.permute.xlu0 %745
      %747 = vrot.lane.b32.xlu0 %v744, 1
      %v748 = vpop.permute.xlu0 %747
      %v749 = vsel %vm247, %v746, %v748
      %v752 = vsel %vm247, 0.0, %v746
      %v753 = vsel %vm256, %v752, 0.0
      %v754 = vsel %vm257, %v749, 0.0
      %755 = vst [vmem:[#allocation1] ss:$4 sm:$0xff] %v197
      %v756 = vld.sshfl [vmem:[#allocation1] sm:$0xff pattern:$0x73625140]
      %v757 = vld.sshfl [vmem:[#allocation1 + $0x8] sm:$0xff pattern:$0x73625140]
      %758 = vrot.lane.b32.xlu0 %v756, 127
      %v759 = vpop.permute.xlu0 %758
      %760 = vrot.lane.b32.xlu0 %v757, 127
      %v761 = vpop.permute.xlu0 %760
      %v762 = vsel %vm267, %v759, %v761
      %v765 = vsel %vm267, %v761, 0.0
      %v766 = vsel %vm276, %v762, 0.0
      %v767 = vsel %vm277, %v765, 0.0
      %768 = vst [vmem:[#allocation1] ss:$4 sm:$0xff] %v197
      %v769 = vld.sshfl [vmem:[#allocation1] sm:$0xff pattern:$0x73625140]
      %v770 = vld.sshfl [vmem:[#allocation1 + $0x8] sm:$0xff pattern:$0x73625140]
      %771 = vrot.lane.b32.xlu0 %v769, 126
      %v772 = vpop.permute.xlu0 %771
      %773 = vrot.lane.b32.xlu0 %v770, 126
      %v774 = vpop.permute.xlu0 %773
      %v775 = vsel %vm287, %v772, %v774
      %v778 = vsel %vm287, %v774, 0.0
      %v779 = vsel %vm296, %v775, 0.0
      %v780 = vsel %vm297, %v778, 0.0
      %781 = vst [vmem:[#allocation1] ss:$4 sm:$0xff] %v197
      %v782 = vld.sshfl [vmem:[#allocation1] sm:$0xff pattern:$0x73625140]
      %v783 = vld.sshfl [vmem:[#allocation1 + $0x8] sm:$0xff pattern:$0x73625140]
      %784 = vrot.lane.b32.xlu0 %v782, 125
      %v785 = vpop.permute.xlu0 %784
      %786 = vrot.lane.b32.xlu0 %v783, 125
      %v787 = vpop.permute.xlu0 %786
      %v788 = vsel %vm307, %v785, %v787
      %v791 = vsel %vm307, %v787, 0.0
      %v792 = vsel %vm316, %v788, 0.0
      %v793 = vsel %vm317, %v791, 0.0
      %s794 = sld [smem:[#allocation8 + $0x31]]
      %v795 = vstv %s794
      %v796 = vmul.f32 %v727, %v795
      %v797 = vmul.f32 %v728, %v795
      %s798 = sld [smem:[#allocation8 + $0x32]]
      %v799 = vstv %s798
      %v800 = vmul.f32 %v740, %v799
      %v801 = vmul.f32 %v741, %v799
      %v802 = vadd.f32 %v796, %v800
      %v803 = vadd.f32 %v797, %v801
      %s804 = sld [smem:[#allocation8 + $0x33]]
      %v805 = vstv %s804
      %v806 = vmul.f32 %v753, %v805
      %v807 = vmul.f32 %v754, %v805
      %v808 = vadd.f32 %v802, %v806
      %v809 = vadd.f32 %v803, %v807
      %s810 = sld [smem:[#allocation8 + $0x34]]
      %v811 = vstv %s810
      %v812 = vmul.f32 %v197, %v811
      %814 = vst [vmem:[#allocation1] ss:$4 sm:$0xff] %v812
      %v815 = vld.sshfl [vmem:[#allocation1] sm:$0xff pattern:$0x73625140]
      %v816 = vld.sshfl [vmem:[#allocation1 + $0x8] sm:$0xff pattern:$0x73625140]
      %v819 = vadd.f32 %v808, %v815
      %v820 = vadd.f32 %v809, %v816
      %s821 = sld [smem:[#allocation8 + $0x35]]
      %v822 = vstv %s821
      %v823 = vmul.f32 %v766, %v822
      %v824 = vmul.f32 %v767, %v822
      %v825 = vadd.f32 %v819, %v823
      %v826 = vadd.f32 %v820, %v824
      %s827 = sld [smem:[#allocation8 + $0x36]]
      %v828 = vstv %s827
      %v829 = vmul.f32 %v779, %v828
      %v830 = vmul.f32 %v780, %v828
      %v831 = vadd.f32 %v825, %v829
      %v832 = vadd.f32 %v826, %v830
      %s833 = sld [smem:[#allocation8 + $0x37]]
      %v834 = vstv %s833
      %v835 = vmul.f32 %v792, %v834
      %v836 = vmul.f32 %v793, %v834
      %v837 = vadd.f32 %v831, %v835
      %v838 = vadd.f32 %v832, %v836
      %841 = vrot.lane.b32.xlu0 %v837, 48
      %v842 = vpop.permute.xlu0 %841
      %843 = vrot.lane.b32.xlu0 %v838, 48
      %v844 = vpop.permute.xlu0 %843
      %v845 = vsel %vm371, %v842, %v844
      %v848 = vsel %vm371, 0.0, %v842
      %v849 = vadd.f32 %v713, %v848
      %v850 = vadd.f32 %v714, %v845
      %s851 = sld [smem:[#allocation8 + $0x38]]
      %v852 = vstv %s851
      %v853 = vmul.f32 %v727, %v852
      %v854 = vmul.f32 %v728, %v852
      %s855 = sld [smem:[#allocation8 + $0x39]]
      %v856 = vstv %s855
      %v857 = vmul.f32 %v740, %v856
      %v858 = vmul.f32 %v741, %v856
      %v859 = vadd.f32 %v853, %v857
      %v860 = vadd.f32 %v854, %v858
      %s861 = sld [smem:[#allocation8 + $0x3a]]
      %v862 = vstv %s861
      %v863 = vmul.f32 %v753, %v862
      %v864 = vmul.f32 %v754, %v862
      %v865 = vadd.f32 %v859, %v863
      %v866 = vadd.f32 %v860, %v864
      %s867 = sld [smem:[#allocation8 + $0x3b]]
      %v868 = vstv %s867
      %v869 = vmul.f32 %v197, %v868
      %871 = vst [vmem:[#allocation1] ss:$4 sm:$0xff] %v869
      %v872 = vld.sshfl [vmem:[#allocation1] sm:$0xff pattern:$0x73625140]
      %v873 = vld.sshfl [vmem:[#allocation1 + $0x8] sm:$0xff pattern:$0x73625140]
      %v876 = vadd.f32 %v865, %v872
      %v877 = vadd.f32 %v866, %v873
      %s878 = sld [smem:[#allocation8 + $0x3c]]
      %v879 = vstv %s878
      %v880 = vmul.f32 %v766, %v879
      %v881 = vmul.f32 %v767, %v879
      %v882 = vadd.f32 %v876, %v880
      %v883 = vadd.f32 %v877, %v881
      %s884 = sld [smem:[#allocation8 + $0x3d]]
      %v885 = vstv %s884
      %v886 = vmul.f32 %v779, %v885
      %v887 = vmul.f32 %v780, %v885
      %v888 = vadd.f32 %v882, %v886
      %v889 = vadd.f32 %v883, %v887
      %s890 = sld [smem:[#allocation8 + $0x3e]]
      %v891 = vstv %s890
      %v892 = vmul.f32 %v792, %v891
      %v893 = vmul.f32 %v793, %v891
      %v894 = vadd.f32 %v888, %v892
      %v895 = vadd.f32 %v889, %v893
      %898 = vrot.lane.b32.xlu0 %v894, 32
      %v899 = vpop.permute.xlu0 %898
      %900 = vrot.lane.b32.xlu0 %v895, 32
      %v901 = vpop.permute.xlu0 %900
      %v902 = vsel %vm429, %v899, %v901
      %v905 = vsel %vm429, 0.0, %v899
      %v906 = vadd.f32 %v849, %v905
      %v907 = vadd.f32 %v850, %v902
      %s908 = sld [smem:[#allocation8 + $0x3f]]
      %v909 = vstv %s908
      %v910 = vmul.f32 %v727, %v909
      %v911 = vmul.f32 %v728, %v909
      %s912 = sld [smem:[#allocation8 + $0x40]]
      %v913 = vstv %s912
      %v914 = vmul.f32 %v740, %v913
      %v915 = vmul.f32 %v741, %v913
      %v916 = vadd.f32 %v910, %v914
      %v917 = vadd.f32 %v911, %v915
      %s918 = sld [smem:[#allocation8 + $0x41]]
      %v919 = vstv %s918
      %v920 = vmul.f32 %v753, %v919
      %v921 = vmul.f32 %v754, %v919
      %v922 = vadd.f32 %v916, %v920
      %v923 = vadd.f32 %v917, %v921
      %s924 = sld [smem:[#allocation8 + $0x42]]
      %v925 = vstv %s924
      %v926 = vmul.f32 %v197, %v925
      %928 = vst [vmem:[#allocation1] ss:$4 sm:$0xff] %v926
      %v929 = vld.sshfl [vmem:[#allocation1] sm:$0xff pattern:$0x73625140]
      %v930 = vld.sshfl [vmem:[#allocation1 + $0x8] sm:$0xff pattern:$0x73625140]
      %v933 = vadd.f32 %v922, %v929
      %v934 = vadd.f32 %v923, %v930
      %s935 = sld [smem:[#allocation8 + $0x43]]
      %v936 = vstv %s935
      %v937 = vmul.f32 %v766, %v936
      %v938 = vmul.f32 %v767, %v936
      %v939 = vadd.f32 %v933, %v937
      %v940 = vadd.f32 %v934, %v938
      %s941 = sld [smem:[#allocation8 + $0x44]]
      %v942 = vstv %s941
      %v943 = vmul.f32 %v779, %v942
      %v944 = vmul.f32 %v780, %v942
      %v945 = vadd.f32 %v939, %v943
      %v946 = vadd.f32 %v940, %v944
      %s947 = sld [smem:[#allocation8 + $0x45]]
      %v948 = vstv %s947
      %v949 = vmul.f32 %v792, %v948
      %v950 = vmul.f32 %v793, %v948
      %v951 = vadd.f32 %v945, %v949
      %v952 = vadd.f32 %v946, %v950
      %955 = vrot.lane.b32.xlu0 %v951, 16
      %v956 = vpop.permute.xlu0 %955
      %957 = vrot.lane.b32.xlu0 %v952, 16
      %v958 = vpop.permute.xlu0 %957
      %v959 = vsel %vm487, %v956, %v958
      %v962 = vsel %vm487, 0.0, %v956
      %v963 = vadd.f32 %v906, %v962
      %v964 = vadd.f32 %v907, %v959
      %s965 = sld [smem:[#allocation8 + $0x46]]
      %v966 = vstv %s965
      %v967 = vmul.f32 %v727, %v966
      %v968 = vmul.f32 %v728, %v966
      %s969 = sld [smem:[#allocation8 + $0x47]]
      %v970 = vstv %s969
      %v971 = vmul.f32 %v740, %v970
      %v972 = vmul.f32 %v741, %v970
      %v973 = vadd.f32 %v967, %v971
      %v974 = vadd.f32 %v968, %v972
      %s975 = sld [smem:[#allocation8 + $0x48]]
      %v976 = vstv %s975
      %v977 = vmul.f32 %v753, %v976
      %v978 = vmul.f32 %v754, %v976
      %v979 = vadd.f32 %v973, %v977
      %v980 = vadd.f32 %v974, %v978
      %s981 = sld [smem:[#allocation8 + $0x49]]
      %v982 = vstv %s981
      %v983 = vmul.f32 %v197, %v982
      %985 = vst [vmem:[#allocation1] ss:$4 sm:$0xff] %v983
      %v986 = vld.sshfl [vmem:[#allocation1] sm:$0xff pattern:$0x73625140]
      %v987 = vld.sshfl [vmem:[#allocation1 + $0x8] sm:$0xff pattern:$0x73625140]
      %v990 = vadd.f32 %v979, %v986
      %v991 = vadd.f32 %v980, %v987
      %s992 = sld [smem:[#allocation8 + $0x4a]]
      %v993 = vstv %s992
      %v994 = vmul.f32 %v766, %v993
      %v995 = vmul.f32 %v767, %v993
      %v996 = vadd.f32 %v990, %v994
      %v997 = vadd.f32 %v991, %v995
      %s998 = sld [smem:[#allocation8 + $0x4b]]
      %v999 = vstv %s998
      %v1000 = vmul.f32 %v779, %v999
      %v1001 = vmul.f32 %v780, %v999
      %v1002 = vadd.f32 %v996, %v1000
      %v1003 = vadd.f32 %v997, %v1001
      %s1004 = sld [smem:[#allocation8 + $0x4c]]
      %v1005 = vstv %s1004
      %v1006 = vmul.f32 %v792, %v1005
      %v1007 = vmul.f32 %v793, %v1005
      %v1008 = vadd.f32 %v1002, %v1006
      %v1009 = vadd.f32 %v1003, %v1007
      %v1010 = vadd.f32 %v963, %v1008
      %v1011 = vadd.f32 %v964, %v1009
      %s1012 = sld [smem:[#allocation8 + $0x4d]]
      %v1013 = vstv %s1012
      %v1014 = vmul.f32 %v727, %v1013
      %v1015 = vmul.f32 %v728, %v1013
      %s1016 = sld [smem:[#allocation8 + $0x4e]]
      %v1017 = vstv %s1016
      %v1018 = vmul.f32 %v740, %v1017
      %v1019 = vmul.f32 %v741, %v1017
      %v1020 = vadd.f32 %v1014, %v1018
      %v1021 = vadd.f32 %v1015, %v1019
      %s1022 = sld [smem:[#allocation8 + $0x4f]]
      %v1023 = vstv %s1022
      %v1024 = vmul.f32 %v753, %v1023
      %v1025 = vmul.f32 %v754, %v1023
      %v1026 = vadd.f32 %v1020, %v1024
      %v1027 = vadd.f32 %v1021, %v1025
      %s1028 = sld [smem:[#allocation8 + $0x50]]
      %v1029 = vstv %s1028
      %v1030 = vmul.f32 %v197, %v1029
      %1032 = vst [vmem:[#allocation1] ss:$4 sm:$0xff] %v1030
      %v1033 = vld.sshfl [vmem:[#allocation1] sm:$0xff pattern:$0x73625140]
      %v1034 = vld.sshfl [vmem:[#allocation1 + $0x8] sm:$0xff pattern:$0x73625140]
      %v1037 = vadd.f32 %v1026, %v1033
      %v1038 = vadd.f32 %v1027, %v1034
      %s1039 = sld [smem:[#allocation8 + $0x51]]
      %v1040 = vstv %s1039
      %v1041 = vmul.f32 %v766, %v1040
      %v1042 = vmul.f32 %v767, %v1040
      %v1043 = vadd.f32 %v1037, %v1041
      %v1044 = vadd.f32 %v1038, %v1042
      %s1045 = sld [smem:[#allocation8 + $0x52]]
      %v1046 = vstv %s1045
      %v1047 = vmul.f32 %v779, %v1046
      %v1048 = vmul.f32 %v780, %v1046
      %v1049 = vadd.f32 %v1043, %v1047
      %v1050 = vadd.f32 %v1044, %v1048
      %s1051 = sld [smem:[#allocation8 + $0x53]]
      %v1052 = vstv %s1051
      %v1053 = vmul.f32 %v792, %v1052
      %v1054 = vmul.f32 %v793, %v1052
      %v1055 = vadd.f32 %v1049, %v1053
      %v1056 = vadd.f32 %v1050, %v1054
      %1059 = vrot.lane.b32.xlu0 %v1055, 112
      %v1060 = vpop.permute.xlu0 %1059
      %1061 = vrot.lane.b32.xlu0 %v1056, 112
      %v1062 = vpop.permute.xlu0 %1061
      %v1063 = vsel %vm592, %v1060, %v1062
      %v1066 = vsel %vm592, %v1062, 0.0
      %v1067 = vadd.f32 %v1010, %v1063
      %v1068 = vadd.f32 %v1011, %v1066
      %s1069 = sld [smem:[#allocation8 + $0x54]]
      %v1070 = vstv %s1069
      %v1071 = vmul.f32 %v727, %v1070
      %v1072 = vmul.f32 %v728, %v1070
      %s1073 = sld [smem:[#allocation8 + $0x55]]
      %v1074 = vstv %s1073
      %v1075 = vmul.f32 %v740, %v1074
      %v1076 = vmul.f32 %v741, %v1074
      %v1077 = vadd.f32 %v1071, %v1075
      %v1078 = vadd.f32 %v1072, %v1076
      %s1079 = sld [smem:[#allocation8 + $0x56]]
      %v1080 = vstv %s1079
      %v1081 = vmul.f32 %v753, %v1080
      %v1082 = vmul.f32 %v754, %v1080
      %v1083 = vadd.f32 %v1077, %v1081
      %v1084 = vadd.f32 %v1078, %v1082
      %s1085 = sld [smem:[#allocation8 + $0x57]]
      %v1086 = vstv %s1085
      %v1087 = vmul.f32 %v197, %v1086
      %1089 = vst [vmem:[#allocation1] ss:$4 sm:$0xff] %v1087
      %v1090 = vld.sshfl [vmem:[#allocation1] sm:$0xff pattern:$0x73625140]
      %v1091 = vld.sshfl [vmem:[#allocation1 + $0x8] sm:$0xff pattern:$0x73625140]
      %v1094 = vadd.f32 %v1083, %v1090
      %v1095 = vadd.f32 %v1084, %v1091
      %s1096 = sld [smem:[#allocation8 + $0x58]]
      %v1097 = vstv %s1096
      %v1098 = vmul.f32 %v766, %v1097
      %v1099 = vmul.f32 %v767, %v1097
      %v1100 = vadd.f32 %v1094, %v1098
      %v1101 = vadd.f32 %v1095, %v1099
      %s1102 = sld [smem:[#allocation8 + $0x59]]
      %v1103 = vstv %s1102
      %v1104 = vmul.f32 %v779, %v1103
      %v1105 = vmul.f32 %v780, %v1103
      %v1106 = vadd.f32 %v1100, %v1104
      %v1107 = vadd.f32 %v1101, %v1105
      %s1108 = sld [smem:[#allocation8 + $0x5a]]
      %v1109 = vstv %s1108
      %v1110 = vmul.f32 %v792, %v1109
      %v1111 = vmul.f32 %v793, %v1109
      %v1112 = vadd.f32 %v1106, %v1110
      %v1113 = vadd.f32 %v1107, %v1111
      %1116 = vrot.lane.b32.xlu0 %v1112, 96
      %v1117 = vpop.permute.xlu0 %1116
      %1118 = vrot.lane.b32.xlu0 %v1113, 96
      %v1119 = vpop.permute.xlu0 %1118
      %v1120 = vsel %vm650, %v1117, %v1119
      %v1123 = vsel %vm650, %v1119, 0.0
      %v1124 = vadd.f32 %v1067, %v1120
      %v1125 = vadd.f32 %v1068, %v1123
      %s1126 = sld [smem:[#allocation8 + $0x5b]]
      %v1127 = vstv %s1126
      %v1128 = vmul.f32 %v727, %v1127
      %v1129 = vmul.f32 %v728, %v1127
      %s1130 = sld [smem:[#allocation8 + $0x5c]]
      %v1131 = vstv %s1130
      %v1132 = vmul.f32 %v740, %v1131
      %v1133 = vmul.f32 %v741, %v1131
      %v1134 = vadd.f32 %v1128, %v1132
      %v1135 = vadd.f32 %v1129, %v1133
      %s1136 = sld [smem:[#allocation8 + $0x5d]]
      %v1137 = vstv %s1136
      %v1138 = vmul.f32 %v753, %v1137
      %v1139 = vmul.f32 %v754, %v1137
      %v1140 = vadd.f32 %v1134, %v1138
      %v1141 = vadd.f32 %v1135, %v1139
      %s1142 = sld [smem:[#allocation8 + $0x5e]]
      %v1143 = vstv %s1142
      %v1144 = vmul.f32 %v197, %v1143
      %1146 = vst [vmem:[#allocation1] ss:$4 sm:$0xff] %v1144
      %v1147 = vld.sshfl [vmem:[#allocation1] sm:$0xff pattern:$0x73625140]
      %v1148 = vld.sshfl [vmem:[#allocation1 + $0x8] sm:$0xff pattern:$0x73625140]
      %v1151 = vadd.f32 %v1140, %v1147
      %v1152 = vadd.f32 %v1141, %v1148
      %s1153 = sld [smem:[#allocation8 + $0x5f]]
      %v1154 = vstv %s1153
      %v1155 = vmul.f32 %v766, %v1154
      %v1156 = vmul.f32 %v767, %v1154
      %v1157 = vadd.f32 %v1151, %v1155
      %v1158 = vadd.f32 %v1152, %v1156
      %s1159 = sld [smem:[#allocation8 + $0x60]]
      %v1160 = vstv %s1159
      %v1161 = vmul.f32 %v779, %v1160
      %v1162 = vmul.f32 %v780, %v1160
      %v1163 = vadd.f32 %v1157, %v1161
      %v1164 = vadd.f32 %v1158, %v1162
      %s1165 = sld [smem:[#allocation8 + $0x61]]
      %v1166 = vstv %s1165
      %v1167 = vmul.f32 %v792, %v1166
      %v1168 = vmul.f32 %v793, %v1166
      %v1169 = vadd.f32 %v1163, %v1167
      %v1170 = vadd.f32 %v1164, %v1168
      %1173 = vrot.lane.b32.xlu0 %v1169, 80
      %v1174 = vpop.permute.xlu0 %1173
      %1175 = vrot.lane.b32.xlu0 %v1170, 80
      %v1176 = vpop.permute.xlu0 %1175
      %v1177 = vsel %vm708, %v1174, %v1176
      %v1180 = vsel %vm708, %v1176, 0.0
      %v1181 = vadd.f32 %v1124, %v1177
      %v1182 = vadd.f32 %v1125, %v1180
      %v1183 = vxor.u32 %v1181, 2147483648
      %v1184 = vxor.u32 %v1182, 2147483648
      %v1185 = vmul.f32 %v1183, 1.442695
      %v1186 = vpow.pop %v1185
      %v1187 = vmul.f32 %v1184, 1.442695
      %v1188 = vpow.pop %v1187
      %v1189 = vadd.f32 %v1186, 1.0
      %v1190 = vadd.f32 %v1188, 1.0
      %v1191 = vrcp.pop %v1189
      %v1192 = vmul.f32 %v1189, %v1191
      %v1193 = vsub.f32 1.0, %v1192
      %v1194 = vmul.f32 %v1191, %v1193
      %v1195 = vadd.f32 %v1191, %v1194
      %vm1196 = vweird.f32 %v1189
      %vm1197 = vweird.f32 %v1191
      %vm1198 = vmor %vm1196, %vm1197
      %v1199 = vsel %vm1198, %v1191, %v1195
      %v1200 = vand.u32 2147483647, %v1189
      %vm1201 = vcmp.eq.f32.partialorder %v1200, 8.507059e+37
      %v1202 = vand.u32 %v1189, 2147483648
      %v1203 = vor.u32 1.1754944e-38, %v1202
      %v1204 = vsel %vm1201, %v1203, %v1199
      %v1205 = vmul.f32 1.0, %v1204
      %v1206 = vrcp.pop %v1190
      %v1207 = vmul.f32 %v1190, %v1206
      %v1208 = vsub.f32 1.0, %v1207
      %v1209 = vmul.f32 %v1206, %v1208
      %v1210 = vadd.f32 %v1206, %v1209
      %vm1211 = vweird.f32 %v1190
      %vm1212 = vweird.f32 %v1206
      %vm1213 = vmor %vm1211, %vm1212
      %v1214 = vsel %vm1213, %v1206, %v1210
      %v1215 = vand.u32 2147483647, %v1190
      %vm1216 = vcmp.eq.f32.partialorder %v1215, 8.507059e+37
      %v1217 = vand.u32 %v1190, 2147483648
      %v1218 = vor.u32 1.1754944e-38, %v1217
      %v1219 = vsel %vm1216, %v1218, %v1214
      %v1220 = vmul.f32 1.0, %v1219
      %v1223 = vrot.slane %v1220, 6
      %v1224 = vsel %vm154, %v1205, %v1223
      %1226 = vst [vmem:[#allocation11] sm:$0xf] %v1224
    $region33: #{tpu_custom_call.1} parent=1 // pred_fallthru
      _
    // Predicated region
    $region34: #{tpu_custom_call.1} parent=1 // pred_check
      _
    $region35: #{tpu_custom_call.1} parent=1 // pred_check_branch
      %1228 = sbr.rel (0) target = $region37
    $region36: #{tpu_custom_call.1} parent=1 // pred_region
      %1230 = vsyncadd [#allocation6], 0
      %s1232 = sshll.u32 [#allocation11], 4
      %s1233 = int_to_ptr.vmem [resolvable:$true] %s1232
      %s1234 = sshll.u32 %s3, 4
      %s1235 = int_to_ptr.hbm [resolvable:$true] %s1234
      %1237 = dma.vmem_to_hbm [thread:$0]  %s1233, 64, %s1235, [#allocation6]
    $region37: #{tpu_custom_call.1} parent=1 // pred_fallthru
      _
    // Predicated region
    $region38: #{tpu_custom_call.1} parent=1 // pred_check
      _
    $region39: #{tpu_custom_call.1} parent=1 // pred_check_branch
      %1239 = sbr.rel (0) target = $region41
    $region40: #{tpu_custom_call.1} parent=1 // pred_region
      %1241 = dma.done [#allocation6], 64
    $region41: #{tpu_custom_call.1} parent=1 // pred_fallthru
      _
    %1242 = vsyncpa [#allocation5], 1
    %1243 = vsyncpa [#allocation10], 1
    %1244 = vsyncpa [#allocation6], 1
    %1245 = vsyncpa [#allocation7], 1

</llo_original>
